<compile_context>
chip_gen: v7x
topology: tpu7x:2x2x1
jax: 0.10.0
libtpu: 0.0.40
codegen_flags: <defaults>
</compile_context>

<pallas_src>
import functools

import jax
import jax.numpy as jnp
from jax.experimental import pallas as pl
from jax.experimental.pallas import tpu as pltpu

BASELINE = 3.0     # Vanilla_q_phi_x baseline
BETA = 1.0         # Model beta
LANE = 128         # TPU lane width
TB_MAX = 512       # max rows per grid step (amortizes ~0.35 us/step overhead)
BF16_MIN_HID = 512 # use bf16 matmul operands only once the MXU is throughput bound


def _round_up(n, k):
    return ((n + k - 1) // k) * k


def _softplus(z):
    # numerically stable softplus (f32, EUP exp/log1p)
    return jnp.maximum(z, 0.0) + jnp.log1p(jnp.exp(-jnp.abs(z)))


def qphi_kernel(xmm_ref, w1_ref, w2_ref, w3_ref,
                v1l_ref, v1xm_ref, v2_ref, v3_ref,
                bias_ref, out_ref, *, d_pad, h_pad):
    """Fused Vanilla_q_phi_x for one (TB, 2*d_pad) row tile.

    xmm_ref : (TB, 2*d_pad)  cols [0:D]          = x*m + (1-m)*baseline (zero-padded to d_pad)
                             cols [d_pad:d_pad+D]= m                     (zero-padded)
    out_ref : (TB, 2*d_pad)  cols [0:d_pad] = loc*m ; cols [d_pad:] = softplus(scale)+1e-5
    """
    cd = w1_ref.dtype                               # compute dtype (f32 or bf16)
    xmm = xmm_ref[...]
    m = xmm[:, d_pad:].astype(jnp.float32)          # mask recovered in-kernel (0/1 exact in bf16)

    biases = bias_ref[...]                          # (8, BW) f32, consolidated bias block
    b1 = biases[0:1, :h_pad]
    b2 = biases[1:2, :h_pad]
    b3 = biases[2:3, :d_pad]
    c1 = biases[3:4, :h_pad]
    c2 = biases[4:5, :h_pad]
    c3 = biases[5:6, :d_pad]

    # loc_net(cat([x, m], -1)): Linear -> ReLU -> Linear -> ReLU -> Linear
    h = jnp.dot(xmm, w1_ref[...], preferred_element_type=jnp.float32) + b1
    h = jnp.maximum(h, 0.0)
    h = jnp.dot(h.astype(cd), w2_ref[...], preferred_element_type=jnp.float32) + b2
    h = jnp.maximum(h, 0.0)
    loc = jnp.dot(h.astype(cd), w3_ref[...], preferred_element_type=jnp.float32) + b3

    # scale_net(cat([loc.detach(), x, m], -1)) -- loc used directly (forward value identical;
    # see TODO(synk) about training/detach).
    g = (jnp.dot(loc.astype(cd), v1l_ref[...], preferred_element_type=jnp.float32)
         + jnp.dot(xmm, v1xm_ref[...], preferred_element_type=jnp.float32)
         + c1)
    g = jnp.maximum(g, 0.0)
    g = jnp.dot(g.astype(cd), v2_ref[...], preferred_element_type=jnp.float32) + c2
    g = jnp.maximum(g, 0.0)
    s = jnp.dot(g.astype(cd), v3_ref[...], preferred_element_type=jnp.float32) + c3

    # lane-aligned, unmasked stores into the merged output block
    out_ref[:, :d_pad] = loc * m
    out_ref[:, d_pad:] = _softplus(s) + 1e-5


def run_qphi(params, x, m):
    """Single fused-kernel launch over all rows. Returns q_loc, q_scale of shape (rows, D)."""
    rows, D = x.shape
    H = params['w2'].shape[0]

    DP = _round_up(D, LANE)
    HP = _round_up(H, LANE)
    BW = max(DP, HP)

    use_bf16 = H >= BF16_MIN_HID
    cd = jnp.bfloat16 if use_bf16 else jnp.float32
    itemsize = 2 if use_bf16 else 4

    # Row tile: as large as possible, but keep >= 2 grid steps so the 'parallel' axis can be
    # sharded across both v7x TensorCores.
    if rows > 2 * TB_MAX:
        tb = TB_MAX
    else:
        tb = max(8, _round_up(-(-rows // 2), 8))
    R = _round_up(rows, tb)
    pad = R - rows

    xm = x * m + (1.0 - m) * BASELINE                       # x = x*m + (1-m)*baseline
    xmm = jnp.concatenate(
        [jnp.pad(xm, ((0, pad), (0, DP - D))),
         jnp.pad(m.astype(jnp.float32), ((0, pad), (0, DP - D)))],
        axis=-1).astype(cd)                                 # (R, 2*DP) lane-dense input

    def padw(w, r, c):
        return jnp.pad(w, ((0, r - w.shape[0]), (0, c - w.shape[1]))).astype(cd)

    # loc_net weights (first layer split into x-part / m-part so both are lane-padded)
    w1 = jnp.concatenate([padw(params['w1'][:D], DP, HP),
                          padw(params['w1'][D:], DP, HP)], axis=0)        # (2*DP, HP)
    w2 = padw(params['w2'], HP, HP)
    w3 = padw(params['w3'], HP, DP)
    # scale_net weights (first layer split into loc-part / [x,m]-part)
    v1l = padw(params['v1l'], DP, HP)
    v1xm = jnp.concatenate([padw(params['v1xm'][:D], DP, HP),
                            padw(params['v1xm'][D:], DP, HP)], axis=0)    # (2*DP, HP)
    v2 = padw(params['v2'], HP, HP)
    v3 = padw(params['v3'], HP, DP)

    def padb(b):
        return jnp.pad(b.astype(jnp.float32), ((0, 0), (0, BW - b.shape[1])))

    # consolidated bias block: one (8, BW) f32 operand instead of 7 tiny streams
    biases = jnp.concatenate(
        [padb(params['b1']), padb(params['b2']), padb(params['b3']),
         padb(params['c1']), padb(params['c2']), padb(params['c3']),
         jnp.zeros((2, BW), jnp.float32)], axis=0)

    grid = (R // tb,)
    row_spec = pl.BlockSpec((tb, 2 * DP), lambda i: (i, 0))

    def const(shape):
        nd = len(shape)
        # grid-invariant operand: single-buffered to halve its VMEM footprint
        return pl.BlockSpec(shape, lambda i: (0,) * nd, pipeline_mode=pl.Buffered(1))

    in_specs = [
        row_spec,
        const((2 * DP, HP)), const((HP, HP)), const((HP, DP)),     # loc_net
        const((DP, HP)), const((2 * DP, HP)), const((HP, HP)), const((HP, DP)),  # scale_net
        const((8, BW)),                                            # biases
    ]
    out_specs = pl.BlockSpec((tb, 2 * DP), lambda i: (i, 0))
    out_shape = jax.ShapeDtypeStruct((R, 2 * DP), jnp.float32)

    # explicit VMEM budget: single-buffered weights + double-buffered row streams + headroom
    weight_bytes = (w1.size + w2.size + w3.size + v1l.size + v1xm.size + v2.size + v3.size) \
        * itemsize + biases.size * 4
    stream_bytes = 2 * (tb * 2 * DP * itemsize) + 2 * (tb * 2 * DP * 4)
    interm_bytes = 6 * tb * max(HP, DP) * 4
    vmem_limit = int(min(64 << 20,
                         2 * (weight_bytes + stream_bytes + interm_bytes) + (4 << 20)))

    per_row_macs = (2 * DP * HP + HP * HP + HP * DP          # loc_net
                    + DP * HP + 2 * DP * HP + HP * HP + HP * DP)  # scale_net
    cost = pl.CostEstimate(
        flops=2 * R * per_row_macs,
        transcendentals=2 * R * DP,
        bytes_accessed=R * 2 * DP * itemsize + R * 2 * DP * 4 + weight_bytes,
    )

    out = pl.pallas_call(
        functools.partial(qphi_kernel, d_pad=DP, h_pad=HP),
        grid=grid,
        in_specs=in_specs,
        out_specs=out_specs,
        out_shape=out_shape,
        compiler_params=pltpu.CompilerParams(
            dimension_semantics=("parallel",),
            vmem_limit_bytes=vmem_limit),
        cost_estimate=cost,
    )(xmm, w1, w2, w3, v1l, v1xm, v2, v3, biases)

    q_loc = out[:rows, :D]
    q_scale = out[:rows, DP:DP + D]
    return q_loc, q_scale


def pf_from_q(params, q_loc, q_scale):
    """P_f_: loc = sum(q_loc,-1)+bias ; scale = sqrt(sum(q_scale^2,-1)+softplus(scale)^2)+1e-5."""
    pf_bias = params['pf'][0]
    pf_sp2 = jax.nn.softplus(params['pf'][1]) ** 2
    pf_loc = q_loc.sum(-1) + pf_bias
    pf_scale = jnp.sqrt((q_scale * q_scale).sum(-1) + pf_sp2) + 1e-5
    return pf_loc, pf_scale


def _coalition_mask(key_u, feat_idx, D):
    """m[b,i] = (rank of feature i in a random permutation) <= (rank of feat_idx[b])."""
    r = jax.random.uniform(key_u, (feat_idx.shape[0], D))
    rank = jnp.argsort(jnp.argsort(r, axis=-1), axis=-1)
    thr = jnp.take_along_axis(rank, feat_idx[:, None], axis=-1)
    return (rank <= thr).astype(jnp.float32)


def model_forward(params, x, y, key):
    B, D = x.shape
    sample_size = 2  # p_phi_x_parameters: sample_size(=1) * 2
    k1, k2, k3, k4 = jax.random.split(key, 4)

    # missingness_indicator (training mode): random Shapley coalition per row
    feat_idx = jax.random.randint(k1, (B,), 0, D)
    m = _coalition_mask(k2, feat_idx, D)

    # ---- main branch rows (2B): [x; x] with [m; ones] ---------------------------------------
    x_main = jnp.concatenate([x, x], axis=0)
    m_main = jnp.concatenate([m, jnp.ones_like(m)], axis=0)

    # ---- p_phi_x_parameters rows (4B) -------------------------------------------------------
    fidx_init = jax.random.randint(k3, (B,), 0, D)
    fidx_rep = jnp.repeat(fidx_init, sample_size, axis=0)         # (2B,) interleaved like torch
    m_rep = jnp.repeat(m, sample_size, axis=0)                    # (2B, D)
    m1 = _coalition_mask(k4, fidx_rep, D)                         # coalition incl. feature
    arange = jnp.arange(D)[None, :]
    m2 = jnp.where(arange == fidx_rep[:, None], 0.0, m1)          # coalition excl. feature
    x_rep = jnp.repeat(x, sample_size, axis=0)                    # (2B, D)
    x_shap = jnp.concatenate([x_rep, x_rep], axis=0)              # (4B, D)
    m_shap = jnp.concatenate([m1 * m_rep, m2 * m_rep], axis=0)    # (4B, D)

    # ---- one fused kernel launch over all 6B rows -------------------------------------------
    x_all = jnp.concatenate([x_main, x_shap], axis=0)
    m_all = jnp.concatenate([m_main, m_shap], axis=0)
    qloc_all, qscale_all = run_qphi(params, x_all, m_all)
    pf_loc_all, pf_scale_all = pf_from_q(params, qloc_all, qscale_all)

    # split back: first B rows of the main branch (the '_'-suffixed all-ones halves are unused
    # for the Normal likelihood, as in the PyTorch forward)
    qloc = qloc_all[:B]
    qscale = qscale_all[:B]
    pf_loc = pf_loc_all[:B]
    pf_scale = pf_scale_all[:B]
    py_loc = pf_loc                                               # likelihood == 'Normal'

    # Shapley deltas from the 4B coalition rows
    shap_pf = pf_loc_all[2 * B:]
    p1 = shap_pf[:2 * B]
    p2 = shap_pf[2 * B:]
    shap = (p1 - p2).reshape(B, sample_size)
    s1, s2 = jnp.split(shap, 2, axis=-1)
    ploc1 = s1.mean(-1)
    ploc2_ = s2.mean(-1)

    # Normal log-likelihood, mean over batch
    loglik = (-0.5 * ((y - pf_loc) / pf_scale) ** 2
              - jnp.log(pf_scale) - 0.5 * jnp.log(2.0 * jnp.pi)).mean(0)

    q_loc_g = jnp.take_along_axis(qloc, fidx_init[:, None], axis=1)[:, 0]
    q_scale_g = jnp.take_along_axis(qscale, fidx_init[:, None], axis=1)[:, 0]
    p_scale = q_scale_g
    p_loc = (ploc1 + ploc2_) / 2.0

    # KL( N(q_loc, q_scale) || N(p_loc, p_scale) )
    kld = (jnp.log(p_scale / q_scale_g)
           + (q_scale_g ** 2 + (q_loc_g - p_loc) ** 2) / (2.0 * p_scale ** 2) - 0.5)
    elbo = (loglik - BETA * kld).mean(0)

    delta_red = ploc2_ - q_loc_g
    delta_blue = ploc1 - q_loc_g
    proxy_kld = jnp.abs(delta_blue * jax.lax.stop_gradient(delta_red)) / (1e-5 + 2.0 * p_scale ** 2)
    loss = (loglik - BETA * proxy_kld).mean(0)

    return elbo, loss, proxy_kld, py_loc, q_loc_g.mean()


def init_params(key, d_in, d_hid):
    ks = jax.random.split(key, 8)

    def lin(k, fi, fo):
        kw, kb = jax.random.split(k)
        lim = 1.0 / jnp.sqrt(jnp.float32(fi))
        W = jax.random.uniform(kw, (fi, fo), minval=-lim, maxval=lim, dtype=jnp.float32)
        b = jax.random.uniform(kb, (1, fo), minval=-lim, maxval=lim, dtype=jnp.float32)
        return W, b

    # loc_net: (2*d_in) -> d_hid -> d_hid -> d_in
    W1, b1 = lin(ks[0], 2 * d_in, d_hid)
    W2, b2 = lin(ks[1], d_hid, d_hid)
    W3, b3 = lin(ks[2], d_hid, d_in)
    # scale_net: (3*d_in) -> d_hid -> d_hid -> d_in ; split first weight into [loc | x,m] parts
    V1, c1 = lin(ks[3], 3 * d_in, d_hid)
    V2, c2 = lin(ks[4], d_hid, d_hid)
    V3, c3 = lin(ks[5], d_hid, d_in)
    pf = jax.random.normal(ks[6], (2,), dtype=jnp.float32)     # P_f_ [bias, scale] (raw)
    gamma = jax.random.normal(ks[7], (1,), dtype=jnp.float32)  # unused for Normal likelihood

    return dict(
        w1=W1, b1=b1, w2=W2, b2=b2, w3=W3, b3=b3,
        v1l=V1[:d_in], v1xm=V1[d_in:], c1=c1,
        v2=V2, c2=c2, v3=V3, c3=c3,
        pf=pf, gamma=gamma)


if __name__ == "__main__":
    key = jax.random.PRNGKey(0)
    kp, kx, ky, kf = jax.random.split(key, 4)
    D_IN, D_HID, B = 8, 32, 8

    params = init_params(kp, D_IN, D_HID)
    x = jax.random.normal(kx, (B, D_IN), dtype=jnp.float32)
    y = jax.random.normal(ky, (B,), dtype=jnp.float32)

    fwd = jax.jit(model_forward)
    elbo, loss, proxy_kld, py_x_loc, q_mean = fwd(params, x, y, kf)
    jax.block_until_ready((elbo, loss, proxy_kld, py_x_loc, q_mean))
    print("KERNEL_OK")
</pallas_src>

<mosaic_0001>
module attributes {stable_mosaic.version = 11 : i64} {
  func.func @qphi_kernel(%arg0: i32, %arg1: memref<24x256xf32, #tpu.memory_space<vmem>>, %arg2: memref<256x128xf32, #tpu.memory_space<vmem>>, %arg3: memref<128x128xf32, #tpu.memory_space<vmem>>, %arg4: memref<128x128xf32, #tpu.memory_space<vmem>>, %arg5: memref<128x128xf32, #tpu.memory_space<vmem>>, %arg6: memref<256x128xf32, #tpu.memory_space<vmem>>, %arg7: memref<128x128xf32, #tpu.memory_space<vmem>>, %arg8: memref<128x128xf32, #tpu.memory_space<vmem>>, %arg9: memref<8x128xf32, #tpu.memory_space<vmem>>, %arg10: memref<24x256xf32, #tpu.memory_space<vmem>>) attributes {dimension_semantics = [#tpu.dimension_semantics<parallel>], iteration_bounds = array<i64: 2>, scalar_prefetch = 0 : i64, scratch_operands = 0 : i64, tpu.core_type = #tpu.core_type<tc>, window_params = [{transform_indices = @transform_0, window_bounds = array<i64: 24, 256>}, {pipeline_mode = #tpu.pipeline_mode<synchronous>, transform_indices = @transform_1, window_bounds = array<i64: 256, 128>}, {pipeline_mode = #tpu.pipeline_mode<synchronous>, transform_indices = @transform_2, window_bounds = array<i64: 128, 128>}, {pipeline_mode = #tpu.pipeline_mode<synchronous>, transform_indices = @transform_3, window_bounds = array<i64: 128, 128>}, {pipeline_mode = #tpu.pipeline_mode<synchronous>, transform_indices = @transform_4, window_bounds = array<i64: 128, 128>}, {pipeline_mode = #tpu.pipeline_mode<synchronous>, transform_indices = @transform_5, window_bounds = array<i64: 256, 128>}, {pipeline_mode = #tpu.pipeline_mode<synchronous>, transform_indices = @transform_6, window_bounds = array<i64: 128, 128>}, {pipeline_mode = #tpu.pipeline_mode<synchronous>, transform_indices = @transform_7, window_bounds = array<i64: 128, 128>}, {pipeline_mode = #tpu.pipeline_mode<synchronous>, transform_indices = @transform_8, window_bounds = array<i64: 8, 128>}, {transform_indices = @transform_9, window_bounds = array<i64: 24, 256>}]} {
    %c0 = arith.constant 0 : index
    %c0_0 = arith.constant 0 : index
    %0 = vector.load %arg1[%c0, %c0_0] : memref<24x256xf32, #tpu.memory_space<vmem>>, vector<24x256xf32>
    %1 = vector.extract_strided_slice %0 {offsets = [0, 128], sizes = [24, 128], strides = [1, 1]} : vector<24x256xf32> to vector<24x128xf32>
    %c0_1 = arith.constant 0 : index
    %c0_2 = arith.constant 0 : index
    %2 = vector.load %arg9[%c0_1, %c0_2] : memref<8x128xf32, #tpu.memory_space<vmem>>, vector<8x128xf32>
    %3 = vector.extract_strided_slice %2 {offsets = [0, 0], sizes = [1, 128], strides = [1, 1]} : vector<8x128xf32> to vector<1x128xf32>
    %4 = vector.extract_strided_slice %2 {offsets = [1, 0], sizes = [1, 128], strides = [1, 1]} : vector<8x128xf32> to vector<1x128xf32>
    %5 = vector.extract_strided_slice %2 {offsets = [2, 0], sizes = [1, 128], strides = [1, 1]} : vector<8x128xf32> to vector<1x128xf32>
    %6 = vector.extract_strided_slice %2 {offsets = [3, 0], sizes = [1, 128], strides = [1, 1]} : vector<8x128xf32> to vector<1x128xf32>
    %7 = vector.extract_strided_slice %2 {offsets = [4, 0], sizes = [1, 128], strides = [1, 1]} : vector<8x128xf32> to vector<1x128xf32>
    %8 = vector.extract_strided_slice %2 {offsets = [5, 0], sizes = [1, 128], strides = [1, 1]} : vector<8x128xf32> to vector<1x128xf32>
    %c0_3 = arith.constant 0 : index
    %c0_4 = arith.constant 0 : index
    %9 = vector.load %arg2[%c0_3, %c0_4] : memref<256x128xf32, #tpu.memory_space<vmem>>, vector<256x128xf32>
    %cst = arith.constant dense<0.000000e+00> : vector<24x128xf32>
    %10 = tpu.matmul %0, %9, %cst {dimension_numbers = #tpu.dot_dimension_numbers<[1], [0], [0], [1], [0, 0, 1, 1], [], []>} : vector<24x256xf32>, vector<256x128xf32>, vector<24x128xf32> -> vector<24x128xf32>
    %11 = vector.broadcast %3 : vector<1x128xf32> to vector<24x128xf32>
    %12 = arith.addf %10, %11 : vector<24x128xf32>
    %cst_5 = arith.constant 0.000000e+00 : f32
    %13 = vector.broadcast %cst_5 : f32 to vector<24x128xf32>
    %14 = arith.maximumf %12, %13 : vector<24x128xf32>
    %c0_6 = arith.constant 0 : index
    %c0_7 = arith.constant 0 : index
    %15 = vector.load %arg3[%c0_6, %c0_7] : memref<128x128xf32, #tpu.memory_space<vmem>>, vector<128x128xf32>
    %cst_8 = arith.constant dense<0.000000e+00> : vector<24x128xf32>
    %16 = tpu.matmul %14, %15, %cst_8 {dimension_numbers = #tpu.dot_dimension_numbers<[1], [0], [0], [1], [0, 0, 1, 1], [], []>} : vector<24x128xf32>, vector<128x128xf32>, vector<24x128xf32> -> vector<24x128xf32>
    %17 = vector.broadcast %4 : vector<1x128xf32> to vector<24x128xf32>
    %18 = arith.addf %16, %17 : vector<24x128xf32>
    %cst_9 = arith.constant 0.000000e+00 : f32
    %19 = vector.broadcast %cst_9 : f32 to vector<24x128xf32>
    %20 = arith.maximumf %18, %19 : vector<24x128xf32>
    %c0_10 = arith.constant 0 : index
    %c0_11 = arith.constant 0 : index
    %21 = vector.load %arg4[%c0_10, %c0_11] : memref<128x128xf32, #tpu.memory_space<vmem>>, vector<128x128xf32>
    %cst_12 = arith.constant dense<0.000000e+00> : vector<24x128xf32>
    %22 = tpu.matmul %20, %21, %cst_12 {dimension_numbers = #tpu.dot_dimension_numbers<[1], [0], [0], [1], [0, 0, 1, 1], [], []>} : vector<24x128xf32>, vector<128x128xf32>, vector<24x128xf32> -> vector<24x128xf32>
    %23 = vector.broadcast %5 : vector<1x128xf32> to vector<24x128xf32>
    %24 = arith.addf %22, %23 : vector<24x128xf32>
    %c0_13 = arith.constant 0 : index
    %c0_14 = arith.constant 0 : index
    %25 = vector.load %arg5[%c0_13, %c0_14] : memref<128x128xf32, #tpu.memory_space<vmem>>, vector<128x128xf32>
    %cst_15 = arith.constant dense<0.000000e+00> : vector<24x128xf32>
    %26 = tpu.matmul %24, %25, %cst_15 {dimension_numbers = #tpu.dot_dimension_numbers<[1], [0], [0], [1], [0, 0, 1, 1], [], []>} : vector<24x128xf32>, vector<128x128xf32>, vector<24x128xf32> -> vector<24x128xf32>
    %c0_16 = arith.constant 0 : index
    %c0_17 = arith.constant 0 : index
    %27 = vector.load %arg6[%c0_16, %c0_17] : memref<256x128xf32, #tpu.memory_space<vmem>>, vector<256x128xf32>
    %cst_18 = arith.constant dense<0.000000e+00> : vector<24x128xf32>
    %28 = tpu.matmul %0, %27, %cst_18 {dimension_numbers = #tpu.dot_dimension_numbers<[1], [0], [0], [1], [0, 0, 1, 1], [], []>} : vector<24x256xf32>, vector<256x128xf32>, vector<24x128xf32> -> vector<24x128xf32>
    %29 = arith.addf %26, %28 : vector<24x128xf32>
    %30 = vector.broadcast %6 : vector<1x128xf32> to vector<24x128xf32>
    %31 = arith.addf %29, %30 : vector<24x128xf32>
    %cst_19 = arith.constant 0.000000e+00 : f32
    %32 = vector.broadcast %cst_19 : f32 to vector<24x128xf32>
    %33 = arith.maximumf %31, %32 : vector<24x128xf32>
    %c0_20 = arith.constant 0 : index
    %c0_21 = arith.constant 0 : index
    %34 = vector.load %arg7[%c0_20, %c0_21] : memref<128x128xf32, #tpu.memory_space<vmem>>, vector<128x128xf32>
    %cst_22 = arith.constant dense<0.000000e+00> : vector<24x128xf32>
    %35 = tpu.matmul %33, %34, %cst_22 {dimension_numbers = #tpu.dot_dimension_numbers<[1], [0], [0], [1], [0, 0, 1, 1], [], []>} : vector<24x128xf32>, vector<128x128xf32>, vector<24x128xf32> -> vector<24x128xf32>
    %36 = vector.broadcast %7 : vector<1x128xf32> to vector<24x128xf32>
    %37 = arith.addf %35, %36 : vector<24x128xf32>
    %cst_23 = arith.constant 0.000000e+00 : f32
    %38 = vector.broadcast %cst_23 : f32 to vector<24x128xf32>
    %39 = arith.maximumf %37, %38 : vector<24x128xf32>
    %c0_24 = arith.constant 0 : index
    %c0_25 = arith.constant 0 : index
    %40 = vector.load %arg8[%c0_24, %c0_25] : memref<128x128xf32, #tpu.memory_space<vmem>>, vector<128x128xf32>
    %cst_26 = arith.constant dense<0.000000e+00> : vector<24x128xf32>
    %41 = tpu.matmul %39, %40, %cst_26 {dimension_numbers = #tpu.dot_dimension_numbers<[1], [0], [0], [1], [0, 0, 1, 1], [], []>} : vector<24x128xf32>, vector<128x128xf32>, vector<24x128xf32> -> vector<24x128xf32>
    %42 = vector.broadcast %8 : vector<1x128xf32> to vector<24x128xf32>
    %43 = arith.addf %41, %42 : vector<24x128xf32>
    %44 = arith.mulf %24, %1 : vector<24x128xf32>
    %c0_27 = arith.constant 0 : index
    %c0_28 = arith.constant 0 : index
    %45 = vector.load %arg10[%c0_27, %c0_28] : memref<24x256xf32, #tpu.memory_space<vmem>>, vector<24x128xf32>
    tpu.vector_store %arg10[%c0_27, %c0_28], %44 {strides = array<i32>} : memref<24x256xf32, #tpu.memory_space<vmem>>, vector<24x128xf32>,
    %cst_29 = arith.constant 0.000000e+00 : f32
    %46 = vector.broadcast %cst_29 : f32 to vector<24x128xf32>
    %47 = arith.maximumf %43, %46 : vector<24x128xf32>
    %48 = math.absf %43 : vector<24x128xf32>
    %cst_30 = arith.constant 0.000000e+00 : f32
    %49 = vector.broadcast %cst_30 : f32 to vector<24x128xf32>
    %50 = arith.subf %49, %48 : vector<24x128xf32>
    %51 = math.exp %50 : vector<24x128xf32>
    %52 = math.log1p %51 : vector<24x128xf32>
    %53 = arith.addf %47, %52 : vector<24x128xf32>
    %cst_31 = arith.constant 9.99999974E-6 : f32
    %54 = vector.broadcast %cst_31 : f32 to vector<24x128xf32>
    %55 = arith.addf %53, %54 : vector<24x128xf32>
    %c0_32 = arith.constant 0 : index
    %c128 = arith.constant 128 : index
    %56 = vector.load %arg10[%c0_32, %c128] : memref<24x256xf32, #tpu.memory_space<vmem>>, vector<24x128xf32>
    tpu.vector_store %arg10[%c0_32, %c128], %55 {strides = array<i32>} : memref<24x256xf32, #tpu.memory_space<vmem>>, vector<24x128xf32>,
    return
  }
  func.func @transform_0(%arg0: i32) -> (i32, i32) {
    %c0_i32 = arith.constant 0 : i32
    %c0_i32_0 = arith.constant 0 : i32
    return %arg0, %c0_i32 : i32, i32
  }
  func.func @transform_1(%arg0: i32) -> (i32, i32) {
    %c0_i32 = arith.constant 0 : i32
    %c0_i32_0 = arith.constant 0 : i32
    %c0_i32_1 = arith.constant 0 : i32
    return %c0_i32, %c0_i32_0 : i32, i32
  }
  func.func @transform_2(%arg0: i32) -> (i32, i32) {
    %c0_i32 = arith.constant 0 : i32
    %c0_i32_0 = arith.constant 0 : i32
    %c0_i32_1 = arith.constant 0 : i32
    return %c0_i32, %c0_i32_0 : i32, i32
  }
  func.func @transform_3(%arg0: i32) -> (i32, i32) {
    %c0_i32 = arith.constant 0 : i32
    %c0_i32_0 = arith.constant 0 : i32
    %c0_i32_1 = arith.constant 0 : i32
    return %c0_i32, %c0_i32_0 : i32, i32
  }
  func.func @transform_4(%arg0: i32) -> (i32, i32) {
    %c0_i32 = arith.constant 0 : i32
    %c0_i32_0 = arith.constant 0 : i32
    %c0_i32_1 = arith.constant 0 : i32
    return %c0_i32, %c0_i32_0 : i32, i32
  }
  func.func @transform_5(%arg0: i32) -> (i32, i32) {
    %c0_i32 = arith.constant 0 : i32
    %c0_i32_0 = arith.constant 0 : i32
    %c0_i32_1 = arith.constant 0 : i32
    return %c0_i32, %c0_i32_0 : i32, i32
  }
  func.func @transform_6(%arg0: i32) -> (i32, i32) {
    %c0_i32 = arith.constant 0 : i32
    %c0_i32_0 = arith.constant 0 : i32
    %c0_i32_1 = arith.constant 0 : i32
    return %c0_i32, %c0_i32_0 : i32, i32
  }
  func.func @transform_7(%arg0: i32) -> (i32, i32) {
    %c0_i32 = arith.constant 0 : i32
    %c0_i32_0 = arith.constant 0 : i32
    %c0_i32_1 = arith.constant 0 : i32
    return %c0_i32, %c0_i32_0 : i32, i32
  }
  func.func @transform_8(%arg0: i32) -> (i32, i32) {
    %c0_i32 = arith.constant 0 : i32
    %c0_i32_0 = arith.constant 0 : i32
    %c0_i32_1 = arith.constant 0 : i32
    return %c0_i32, %c0_i32_0 : i32, i32
  }
  func.func @transform_9(%arg0: i32) -> (i32, i32) {
    %c0_i32 = arith.constant 0 : i32
    %c0_i32_0 = arith.constant 0 : i32
    return %arg0, %c0_i32 : i32, i32
  }
}

</mosaic_0001>

<llo_original>
// kernel: mul.2
$region0: #{mul.2}
  #allocation0 [shape = 's32[1]{0}', space=sflag, size = 0x4, scoped, tag = 'scoped memory for mul.2']
  %s0 = inlined_call_operand.<no memory space> [shape: f32[], index: 0, kind: input, shape index: {}]
  %s1 = inlined_call_operand.vmem [shape: f32[8], index: 1, kind: output, shape index: {}]
  %v2 = vstv %s0
  %3 = vst [vmem:[%s1] sm:$0x1] %v2

// kernel: model_forward.3
$region0: #{model_forward.3}
  #allocation0 [shape = 'u32[]', space=smem, size = 0x4, offset = 0x4, fixed_abs, tag = 'smem constant byte address 0x4 - core index']
  #allocation1 [shape = 'u32[144,128]{1,0:T(1,128)}', space=vmem, size = 0x12000, scoped, tag = 'internal scratch']
  %s0 = inlined_call_operand.vmem [shape: f32[48,256], index: 0, kind: input, shape index: {}]
  %s1 = inlined_call_operand.vmem [shape: f32[256,128], index: 1, kind: input, shape index: {}]
  %s2 = inlined_call_operand.vmem [shape: f32[128,128], index: 2, kind: input, shape index: {}]
  %s3 = inlined_call_operand.vmem [shape: f32[128,128], index: 3, kind: input, shape index: {}]
  %s4 = inlined_call_operand.vmem [shape: f32[128,128], index: 4, kind: input, shape index: {}]
  %s5 = inlined_call_operand.vmem [shape: f32[256,128], index: 5, kind: input, shape index: {}]
  %s6 = inlined_call_operand.vmem [shape: f32[128,128], index: 6, kind: input, shape index: {}]
  %s7 = inlined_call_operand.vmem [shape: f32[128,128], index: 7, kind: input, shape index: {}]
  %s8 = inlined_call_operand.vmem [shape: f32[8,128], index: 8, kind: input, shape index: {}]
  %s9 = inlined_call_operand.vmem [shape: f32[48,256], index: 9, kind: output, shape index: {}]
  %s10 = sld [smem:[#allocation0]]
  $region69: #{model_forward.3} parent=0
    _
  %s12 = ssub.s32 1, %s10
  %s13 = scalar_select 0, %s12, %s10
  loop: start=0, step=1, limit=4
  $region2: #{model_forward.3} parent=0 // loop_pre_header
    _
  $region3: #{model_forward.3} parent=0 // loop_header
    %s15 = sphi 0, %s19
    %p16 = scmp.ge.s32.totalorder %s15, 4
    %s25 = sphi 0, %s27
    %s28 = sphi 0, %s25
    %s29 = sphi 0, %s28
    %s45 = sphi 0, %s29
    %s49 = sphi 0, %s49
    %s51 = sphi 0, %s49
    %s52 = sphi 0, %s51
    %s66 = sphi 0, %s52
    %s70 = sphi 0, %s70
    %s72 = sphi 0, %s70
    %s73 = sphi 0, %s72
    %s87 = sphi 0, %s73
    %s91 = sphi 0, %s91
    %s93 = sphi 0, %s91
    %s94 = sphi 0, %s93
    %s108 = sphi 0, %s94
    %s112 = sphi 0, %s112
    %s114 = sphi 0, %s112
    %s115 = sphi 0, %s114
    %s129 = sphi 0, %s115
    %s133 = sphi 0, %s133
    %s135 = sphi 0, %s133
    %s136 = sphi 0, %s135
    %s150 = sphi 0, %s136
    %s154 = sphi 0, %s154
    %s156 = sphi 0, %s154
    %s157 = sphi 0, %s156
    %s171 = sphi 0, %s157
    %s175 = sphi 0, %s175
    %s177 = sphi 0, %s175
    %s178 = sphi 0, %s177
    %s192 = sphi 0, %s178
    %s196 = sphi 0, %s196
    %s198 = sphi 0, %s196
    %s199 = sphi 0, %s198
    %s213 = sphi 0, %s199
    %s219 = sphi 0, %s221
    %s222 = sphi 0, %s219
    %s223 = sphi 0, %s222
    %s239 = sphi 0, %s223
  $region4: #{model_forward.3} parent=0 // loop_header_branch
    %18 = sbr.rel (%p16) target = $region8
  $region5: #{model_forward.3} parent=0 // loop_body
    %s20 = ssub.s32 %s15, 1
    %s21 = ssub.s32 %s15, 2
    %s22 = sadd.s32 %s15, 1
    %s23 = ssub.s32 %s15, %s22
    %p24 = scmp.eq.s32.totalorder %s23, 0
    %s26 = sadd.s32 %s25, 1
    %s27 = scalar_select %p24, %s25, %s26
    %p30 = pneg %p24
    %p31 = scmp.eq.s32.totalorder %s15, 1
    %p32 = por %p30, %p31
    %p33 = scmp.ne.s32.totalorder %s25, %s28
    %p34 = scmp.eq.s32.totalorder %s15, 0
    %p35 = por %p33, %p34
    %p36 = scmp.ne.s32.totalorder %s25, %s28
    %p37 = scmp.eq.s32.totalorder %s20, 1
    %p38 = por %p36, %p37
    %p39 = scmp.ne.s32.totalorder %s28, %s29
    %p40 = scmp.eq.s32.totalorder %s20, 0
    %p41 = por %p39, %p40
    %p42 = scmp.ne.s32.totalorder %s28, %s29
    %p43 = scmp.eq.s32.totalorder %s21, 1
    %p44 = por %p42, %p43
    %p46 = scmp.ne.s32.totalorder %s29, %s45
    %p47 = scmp.eq.s32.totalorder %s21, 0
    %p48 = por %p46, %p47
    %s50 = sadd.s32 %s49, 1
    %p53 = scmp.eq.s32.totalorder %s15, 1
    %p54 = scmp.ne.s32.totalorder %s49, %s51
    %p55 = scmp.eq.s32.totalorder %s15, 0
    %p56 = por %p54, %p55
    %p57 = scmp.ne.s32.totalorder %s49, %s51
    %p58 = scmp.eq.s32.totalorder %s20, 1
    %p59 = por %p57, %p58
    %p60 = scmp.ne.s32.totalorder %s51, %s52
    %p61 = scmp.eq.s32.totalorder %s20, 0
    %p62 = por %p60, %p61
    %p63 = scmp.ne.s32.totalorder %s51, %s52
    %p64 = scmp.eq.s32.totalorder %s21, 1
    %p65 = por %p63, %p64
    %p67 = scmp.ne.s32.totalorder %s52, %s66
    %p68 = scmp.eq.s32.totalorder %s21, 0
    %p69 = por %p67, %p68
    %s71 = sadd.s32 %s70, 1
    %p74 = scmp.eq.s32.totalorder %s15, 1
    %p75 = scmp.ne.s32.totalorder %s70, %s72
    %p76 = scmp.eq.s32.totalorder %s15, 0
    %p77 = por %p75, %p76
    %p78 = scmp.ne.s32.totalorder %s70, %s72
    %p79 = scmp.eq.s32.totalorder %s20, 1
    %p80 = por %p78, %p79
    %p81 = scmp.ne.s32.totalorder %s72, %s73
    %p82 = scmp.eq.s32.totalorder %s20, 0
    %p83 = por %p81, %p82
    %p84 = scmp.ne.s32.totalorder %s72, %s73
    %p85 = scmp.eq.s32.totalorder %s21, 1
    %p86 = por %p84, %p85
    %p88 = scmp.ne.s32.totalorder %s73, %s87
    %p89 = scmp.eq.s32.totalorder %s21, 0
    %p90 = por %p88, %p89
    %s92 = sadd.s32 %s91, 1
    %p95 = scmp.eq.s32.totalorder %s15, 1
    %p96 = scmp.ne.s32.totalorder %s91, %s93
    %p97 = scmp.eq.s32.totalorder %s15, 0
    %p98 = por %p96, %p97
    %p99 = scmp.ne.s32.totalorder %s91, %s93
    %p100 = scmp.eq.s32.totalorder %s20, 1
    %p101 = por %p99, %p100
    %p102 = scmp.ne.s32.totalorder %s93, %s94
    %p103 = scmp.eq.s32.totalorder %s20, 0
    %p104 = por %p102, %p103
    %p105 = scmp.ne.s32.totalorder %s93, %s94
    %p106 = scmp.eq.s32.totalorder %s21, 1
    %p107 = por %p105, %p106
    %p109 = scmp.ne.s32.totalorder %s94, %s108
    %p110 = scmp.eq.s32.totalorder %s21, 0
    %p111 = por %p109, %p110
    %s113 = sadd.s32 %s112, 1
    %p116 = scmp.eq.s32.totalorder %s15, 1
    %p117 = scmp.ne.s32.totalorder %s112, %s114
    %p118 = scmp.eq.s32.totalorder %s15, 0
    %p119 = por %p117, %p118
    %p120 = scmp.ne.s32.totalorder %s112, %s114
    %p121 = scmp.eq.s32.totalorder %s20, 1
    %p122 = por %p120, %p121
    %p123 = scmp.ne.s32.totalorder %s114, %s115
    %p124 = scmp.eq.s32.totalorder %s20, 0
    %p125 = por %p123, %p124
    %p126 = scmp.ne.s32.totalorder %s114, %s115
    %p127 = scmp.eq.s32.totalorder %s21, 1
    %p128 = por %p126, %p127
    %p130 = scmp.ne.s32.totalorder %s115, %s129
    %p131 = scmp.eq.s32.totalorder %s21, 0
    %p132 = por %p130, %p131
    %s134 = sadd.s32 %s133, 1
    %p137 = scmp.eq.s32.totalorder %s15, 1
    %p138 = scmp.ne.s32.totalorder %s133, %s135
    %p139 = scmp.eq.s32.totalorder %s15, 0
    %p140 = por %p138, %p139
    %p141 = scmp.ne.s32.totalorder %s133, %s135
    %p142 = scmp.eq.s32.totalorder %s20, 1
    %p143 = por %p141, %p142
    %p144 = scmp.ne.s32.totalorder %s135, %s136
    %p145 = scmp.eq.s32.totalorder %s20, 0
    %p146 = por %p144, %p145
    %p147 = scmp.ne.s32.totalorder %s135, %s136
    %p148 = scmp.eq.s32.totalorder %s21, 1
    %p149 = por %p147, %p148
    %p151 = scmp.ne.s32.totalorder %s136, %s150
    %p152 = scmp.eq.s32.totalorder %s21, 0
    %p153 = por %p151, %p152
    %s155 = sadd.s32 %s154, 1
    %p158 = scmp.eq.s32.totalorder %s15, 1
    %p159 = scmp.ne.s32.totalorder %s154, %s156
    %p160 = scmp.eq.s32.totalorder %s15, 0
    %p161 = por %p159, %p160
    %p162 = scmp.ne.s32.totalorder %s154, %s156
    %p163 = scmp.eq.s32.totalorder %s20, 1
    %p164 = por %p162, %p163
    %p165 = scmp.ne.s32.totalorder %s156, %s157
    %p166 = scmp.eq.s32.totalorder %s20, 0
    %p167 = por %p165, %p166
    %p168 = scmp.ne.s32.totalorder %s156, %s157
    %p169 = scmp.eq.s32.totalorder %s21, 1
    %p170 = por %p168, %p169
    %p172 = scmp.ne.s32.totalorder %s157, %s171
    %p173 = scmp.eq.s32.totalorder %s21, 0
    %p174 = por %p172, %p173
    %s176 = sadd.s32 %s175, 1
    %p179 = scmp.eq.s32.totalorder %s15, 1
    %p180 = scmp.ne.s32.totalorder %s175, %s177
    %p181 = scmp.eq.s32.totalorder %s15, 0
    %p182 = por %p180, %p181
    %p183 = scmp.ne.s32.totalorder %s175, %s177
    %p184 = scmp.eq.s32.totalorder %s20, 1
    %p185 = por %p183, %p184
    %p186 = scmp.ne.s32.totalorder %s177, %s178
    %p187 = scmp.eq.s32.totalorder %s20, 0
    %p188 = por %p186, %p187
    %p189 = scmp.ne.s32.totalorder %s177, %s178
    %p190 = scmp.eq.s32.totalorder %s21, 1
    %p191 = por %p189, %p190
    %p193 = scmp.ne.s32.totalorder %s178, %s192
    %p194 = scmp.eq.s32.totalorder %s21, 0
    %p195 = por %p193, %p194
    %s197 = sadd.s32 %s196, 1
    %p200 = scmp.eq.s32.totalorder %s15, 1
    %p201 = scmp.ne.s32.totalorder %s196, %s198
    %p202 = scmp.eq.s32.totalorder %s15, 0
    %p203 = por %p201, %p202
    %p204 = scmp.ne.s32.totalorder %s196, %s198
    %p205 = scmp.eq.s32.totalorder %s20, 1
    %p206 = por %p204, %p205
    %p207 = scmp.ne.s32.totalorder %s198, %s199
    %p208 = scmp.eq.s32.totalorder %s20, 0
    %p209 = por %p207, %p208
    %p210 = scmp.ne.s32.totalorder %s198, %s199
    %p211 = scmp.eq.s32.totalorder %s21, 1
    %p212 = por %p210, %p211
    %p214 = scmp.ne.s32.totalorder %s199, %s213
    %p215 = scmp.eq.s32.totalorder %s21, 0
    %p216 = por %p214, %p215
    %s217 = ssub.s32 %s15, %s22
    %p218 = scmp.eq.s32.totalorder %s217, 0
    %s220 = sadd.s32 %s219, 1
    %s221 = scalar_select %p218, %s219, %s220
    %p224 = pneg %p218
    %p225 = scmp.eq.s32.totalorder %s15, 1
    %p226 = por %p224, %p225
    %p227 = scmp.ne.s32.totalorder %s219, %s222
    %p228 = scmp.eq.s32.totalorder %s15, 0
    %p229 = por %p227, %p228
    %p230 = scmp.ne.s32.totalorder %s219, %s222
    %p231 = scmp.eq.s32.totalorder %s20, 1
    %p232 = por %p230, %p231
    %p233 = scmp.ne.s32.totalorder %s222, %s223
    %p234 = scmp.eq.s32.totalorder %s20, 0
    %p235 = por %p233, %p234
    %p236 = scmp.ne.s32.totalorder %s222, %s223
    %p237 = scmp.eq.s32.totalorder %s21, 1
    %p238 = por %p236, %p237
    %p240 = scmp.ne.s32.totalorder %s223, %s239
    %p241 = scmp.eq.s32.totalorder %s21, 0
    %p242 = por %p240, %p241
    %p243 = scmp.le.s32.totalorder 1, %s15
    %p244 = scmp.lt.s32.totalorder %s15, 3
    %p245 = pnand %p243, %p244
    %p246 = pneg %p245
    // Predicated region
    $region9: #{model_forward.3} parent=5 // pred_check
      _
    $region10: #{model_forward.3} parent=5 // pred_check_branch
      %248 = sbr.rel (%p245) target = $region12
    $region11: #{model_forward.3} parent=5 // pred_region
      %s249 = ssub.s32 %s15, 1
      // Predicated region
      $region13: #{model_forward.3} parent=11 // pred_check
        %p250 = pneg %p62
      $region14: #{model_forward.3} parent=11 // pred_check_branch
        %252 = sbr.rel (%p250) target = $region16
      $region15: #{model_forward.3} parent=11 // pred_region
        _
      $region16: #{model_forward.3} parent=11 // pred_fallthru
        _
      // Predicated region
      $region17: #{model_forward.3} parent=11 // pred_check
        %p253 = pneg %p83
      $region18: #{model_forward.3} parent=11 // pred_check_branch
        %255 = sbr.rel (%p253) target = $region20
      $region19: #{model_forward.3} parent=11 // pred_region
        _
      $region20: #{model_forward.3} parent=11 // pred_fallthru
        _
      // Predicated region
      $region21: #{model_forward.3} parent=11 // pred_check
        %p256 = pneg %p104
      $region22: #{model_forward.3} parent=11 // pred_check_branch
        %258 = sbr.rel (%p256) target = $region24
      $region23: #{model_forward.3} parent=11 // pred_region
        _
      $region24: #{model_forward.3} parent=11 // pred_fallthru
        _
      // Predicated region
      $region25: #{model_forward.3} parent=11 // pred_check
        %p259 = pneg %p125
      $region26: #{model_forward.3} parent=11 // pred_check_branch
        %261 = sbr.rel (%p259) target = $region28
      $region27: #{model_forward.3} parent=11 // pred_region
        _
      $region28: #{model_forward.3} parent=11 // pred_fallthru
        _
      // Predicated region
      $region29: #{model_forward.3} parent=11 // pred_check
        %p262 = pneg %p146
      $region30: #{model_forward.3} parent=11 // pred_check_branch
        %264 = sbr.rel (%p262) target = $region32
      $region31: #{model_forward.3} parent=11 // pred_region
        _
      $region32: #{model_forward.3} parent=11 // pred_fallthru
        _
      // Predicated region
      $region33: #{model_forward.3} parent=11 // pred_check
        %p265 = pneg %p167
      $region34: #{model_forward.3} parent=11 // pred_check_branch
        %267 = sbr.rel (%p265) target = $region36
      $region35: #{model_forward.3} parent=11 // pred_region
        _
      $region36: #{model_forward.3} parent=11 // pred_fallthru
        _
      // Predicated region
      $region37: #{model_forward.3} parent=11 // pred_check
        %p268 = pneg %p188
      $region38: #{model_forward.3} parent=11 // pred_check_branch
        %270 = sbr.rel (%p268) target = $region40
      $region39: #{model_forward.3} parent=11 // pred_region
        _
      $region40: #{model_forward.3} parent=11 // pred_fallthru
        _
      // Predicated region
      $region41: #{model_forward.3} parent=11 // pred_check
        %p271 = pneg %p209
      $region42: #{model_forward.3} parent=11 // pred_check_branch
        %273 = sbr.rel (%p271) target = $region44
      $region43: #{model_forward.3} parent=11 // pred_region
        _
      $region44: #{model_forward.3} parent=11 // pred_fallthru
        _
    $region12: #{model_forward.3} parent=5 // pred_fallthru
      _
    %p274 = scmp.lt.s32.totalorder %s15, 2
    // Predicated region
    $region45: #{model_forward.3} parent=5 // pred_check
      %p275 = pneg %p274
    $region46: #{model_forward.3} parent=5 // pred_check_branch
      %277 = sbr.rel (%p275) target = $region48
    $region47: #{model_forward.3} parent=5 // pred_region
      // Predicated region
      $region49: #{model_forward.3} parent=47 // pred_check
        %p278 = pneg %p35
      $region50: #{model_forward.3} parent=47 // pred_check_branch
        %280 = sbr.rel (%p278) target = $region52
      $region51: #{model_forward.3} parent=47 // pred_region
        %s281 = smul.u32 3, %s15
        %p282 = scmp.lt.s32.totalorder %s281, 5
        %s283 = scalar_select %p282, %s281, 5
        %s284 = smul.addr %s283, 2
        %s285 = smul.addr %s284, 8
        %s286 = scalar_lea.vmem %s0, %s285
        %s287 = smul.u32 3, %s15
      $region52: #{model_forward.3} parent=47 // pred_fallthru
        _
    $region48: #{model_forward.3} parent=5 // pred_fallthru
      _
    %p288 = scmp.le.s32.totalorder 1, %s15
    %p289 = scmp.lt.s32.totalorder %s15, 3
    %p290 = pnand %p288, %p289
    %p291 = pneg %p290
    // Predicated region
    $region53: #{model_forward.3} parent=5 // pred_check
      _
    $region54: #{model_forward.3} parent=5 // pred_check_branch
      %293 = sbr.rel (%p290) target = $region56
    $region55: #{model_forward.3} parent=5 // pred_region
      %s294 = ssub.s32 %s15, 1
      %s295 = smul.u32 3, %s20
      %p296 = scmp.lt.s32.totalorder %s295, 5
      %s297 = scalar_select %p296, %s295, 5
      %s298 = smul.addr %s297, 2
      %s299 = smul.addr %s298, 8
      %s300 = scalar_lea.vmem %s0, %s299
      %p301 = pneg %p41
      %p302 = pneg %p38
      %p303 = pneg %p62
      %p304 = pneg %p59
      %p305 = pneg %p83
      %p306 = pneg %p80
      %p307 = pneg %p104
      %p308 = pneg %p101
      %p309 = pneg %p125
      %p310 = pneg %p122
      %p311 = pneg %p146
      %p312 = pneg %p143
      %p313 = pneg %p167
      %p314 = pneg %p164
      %p315 = pneg %p188
      %p316 = pneg %p185
      %p317 = pneg %p209
      %p318 = pneg %p206
      %p319 = pneg %p235
      %p320 = pneg %p232
      %s321 = smul.u32 3, %s20
      %p322 = scmp.lt.s32.totalorder %s321, 5
      %s323 = scalar_select %p322, %s321, 5
      %s324 = smul.addr %s323, 2
      %s325 = smul.addr %s324, 8
      %s326 = scalar_lea.vmem %s9, %s325
      %s327 = smul.u32 3, %s20
      %p328 = scmp.lt.s32.totalorder %s327, 5
      %s329 = scalar_select %p328, %s327, 5
      %s330 = smul.addr %s329, 2
      %s331 = smul.addr %s330, 8
      %s332 = scalar_lea.vmem %s0, %s331
      %s333 = smul.u32 3, %s20
      %s334 = smul.u32 3, %s20
      %p335 = scmp.lt.s32.totalorder %s334, 5
      %s336 = scalar_select %p335, %s334, 5
      %s337 = smul.addr %s336, 2
      %s338 = smul.addr %s337, 8
      %s339 = scalar_lea.vmem %s9, %s338
      %s340 = smul.u32 3, %s20
      %v341 = vld [vmem:[%s332] sm:$0xff]
      %v342 = vld [vmem:[%s332 + $0x8] sm:$0xff]
      %v343 = vld [vmem:[%s332 + $0x10] sm:$0xff]
      %v344 = vld [vmem:[%s332 + $0x18] sm:$0xff]
      %v345 = vld [vmem:[%s332 + $0x20] sm:$0xff]
      %v346 = vld [vmem:[%s332 + $0x28] sm:$0xff]
      %v347 = vld [vmem:[%s8] sm:$0xff]
      %v348 = vld [vmem:[%s1] sm:$0xff]
      %v349 = vld [vmem:[%s1 + $0x8] sm:$0xff]
      %v350 = vld [vmem:[%s1 + $0x10] sm:$0xff]
      %v351 = vld [vmem:[%s1 + $0x18] sm:$0xff]
      %v352 = vld [vmem:[%s1 + $0x20] sm:$0xff]
      %v353 = vld [vmem:[%s1 + $0x28] sm:$0xff]
      %v354 = vld [vmem:[%s1 + $0x30] sm:$0xff]
      %v355 = vld [vmem:[%s1 + $0x38] sm:$0xff]
      %v356 = vld [vmem:[%s1 + $0x40] sm:$0xff]
      %v357 = vld [vmem:[%s1 + $0x48] sm:$0xff]
      %v358 = vld [vmem:[%s1 + $0x50] sm:$0xff]
      %v359 = vld [vmem:[%s1 + $0x58] sm:$0xff]
      %v360 = vld [vmem:[%s1 + $0x60] sm:$0xff]
      %v361 = vld [vmem:[%s1 + $0x68] sm:$0xff]
      %v362 = vld [vmem:[%s1 + $0x70] sm:$0xff]
      %v363 = vld [vmem:[%s1 + $0x78] sm:$0xff]
      %v364 = vld [vmem:[%s1 + $0x80] sm:$0xff]
      %v365 = vld [vmem:[%s1 + $0x88] sm:$0xff]
      %v366 = vld [vmem:[%s1 + $0x90] sm:$0xff]
      %v367 = vld [vmem:[%s1 + $0x98] sm:$0xff]
      %v368 = vld [vmem:[%s1 + $0xa0] sm:$0xff]
      %v369 = vld [vmem:[%s1 + $0xa8] sm:$0xff]
      %v370 = vld [vmem:[%s1 + $0xb0] sm:$0xff]
      %v371 = vld [vmem:[%s1 + $0xb8] sm:$0xff]
      %v372 = vld [vmem:[%s1 + $0xc0] sm:$0xff]
      %v373 = vld [vmem:[%s1 + $0xc8] sm:$0xff]
      %v374 = vld [vmem:[%s1 + $0xd0] sm:$0xff]
      %v375 = vld [vmem:[%s1 + $0xd8] sm:$0xff]
      %v376 = vld [vmem:[%s1 + $0xe0] sm:$0xff]
      %v377 = vld [vmem:[%s1 + $0xe8] sm:$0xff]
      %v378 = vld [vmem:[%s1 + $0xf0] sm:$0xff]
      %v379 = vld [vmem:[%s1 + $0xf8] sm:$0xff]
      %v380 = vlaneseq
      %v381 = vshrl.u32 %v380, 7
      %v382 = vsub.s32 0, %v381
      %v383 = vrot.slane %v347, %v382
      %384 = vmatprep.subr.mxu0 0.0
      %385 = vmatpush1.msra.mxu0 %v348
      %386 = vmatprep.subr.mxu0 0.0
      %387 = vmatpush1.msra.mxu0 %v349
      %388 = vmatprep.subr.mxu0 0.0
      %389 = vmatpush1.msra.mxu0 %v350
      %390 = vmatprep.subr.mxu0 0.0
      %391 = vmatpush1.msra.mxu0 %v351
      %392 = vmatprep.subr.mxu0 0.0
      %393 = vmatpush1.msra.mxu0 %v352
      %394 = vmatprep.subr.mxu0 0.0
      %395 = vmatpush1.msra.mxu0 %v353
      %396 = vmatprep.subr.mxu0 0.0
      %397 = vmatpush1.msra.mxu0 %v354
      %398 = vmatprep.subr.mxu0 0.0
      %399 = vmatpush1.msra.mxu0 %v355
      %400 = vmatprep.subr.mxu0 0.0
      %401 = vmatpush1.msra.mxu0 %v356
      %402 = vmatprep.subr.mxu0 0.0
      %403 = vmatpush1.msra.mxu0 %v357
      %404 = vmatprep.subr.mxu0 0.0
      %405 = vmatpush1.msra.mxu0 %v358
      %406 = vmatprep.subr.mxu0 0.0
      %407 = vmatpush1.msra.mxu0 %v359
      %408 = vmatprep.subr.mxu0 0.0
      %409 = vmatpush1.msra.mxu0 %v360
      %410 = vmatprep.subr.mxu0 0.0
      %411 = vmatpush1.msra.mxu0 %v361
      %412 = vmatprep.subr.mxu0 0.0
      %413 = vmatpush1.msra.mxu0 %v362
      %414 = vmatprep.subr.mxu0 0.0
      %415 = vmatpush1.msra.mxu0 %v363
      %416 = vmatprep.subr.mxu0 0.0
      %417 = vmatpush1.msra.mxu0 %v364
      %418 = vmatprep.subr.mxu0 0.0
      %419 = vmatpush1.msra.mxu0 %v365
      %420 = vmatprep.subr.mxu0 0.0
      %421 = vmatpush1.msra.mxu0 %v366
      %422 = vmatprep.subr.mxu0 0.0
      %423 = vmatpush1.msra.mxu0 %v367
      %424 = vmatprep.subr.mxu0 0.0
      %425 = vmatpush1.msra.mxu0 %v368
      %426 = vmatprep.subr.mxu0 0.0
      %427 = vmatpush1.msra.mxu0 %v369
      %428 = vmatprep.subr.mxu0 0.0
      %429 = vmatpush1.msra.mxu0 %v370
      %430 = vmatprep.subr.mxu0 0.0
      %431 = vmatpush1.msra.mxu0 %v371
      %432 = vmatprep.subr.mxu0 0.0
      %433 = vmatpush1.msra.mxu0 %v372
      %434 = vmatprep.subr.mxu0 0.0
      %435 = vmatpush1.msra.mxu0 %v373
      %436 = vmatprep.subr.mxu0 0.0
      %437 = vmatpush1.msra.mxu0 %v374
      %438 = vmatprep.subr.mxu0 0.0
      %439 = vmatpush1.msra.mxu0 %v375
      %440 = vmatprep.subr.mxu0 0.0
      %441 = vmatpush1.msra.mxu0 %v376
      %442 = vmatprep.subr.mxu0 0.0
      %443 = vmatpush1.msra.mxu0 %v377
      %444 = vmatprep.subr.mxu0 0.0
      %445 = vmatpush1.msra.mxu0 %v378
      %446 = vmatprep.subr.mxu0 0.0
      %447 = vmatpush1.msra.mxu0 %v379
      %448 = vmatprep.mubr.f32.mxu0 %v342
      %449 = vmatmul.mubr.f32.gmra.mrb[0].mxu0 %v341
      %v450 = vpop.f32.mrb[0].mxu0
      %v451 = vadd.f32 %v383, %v450
      %v452 = vpop.f32.mrb[0].mxu0
      %453 = vmatprep.mubr.f32.mxu0 %v344
      %454 = vmatmul.mubr.f32.gmra.mrb[0].mxu0 %v343
      %v455 = vpop.f32.mrb[0].mxu0
      %v456 = vadd.f32 %v383, %v455
      %v457 = vpop.f32.mrb[0].mxu0
      %458 = vmatprep.mubr.f32.mxu0 %v346
      %459 = vmatmul.mubr.f32.gmra.mrb[0].mxu0 %v345
      %v460 = vpop.f32.mrb[0].mxu0
      %v461 = vadd.f32 %v383, %v460
      %v462 = vpop.f32.mrb[0].mxu0
      %463 = vdwg.mxu0
      %v464 = vmax.f32 %v451, 0.0
      %v465 = vmax.f32 %v456, 0.0
      %v466 = vmax.f32 %v461, 0.0
      %v467 = vld [vmem:[%s2] sm:$0xff]
      %v468 = vld [vmem:[%s2 + $0x8] sm:$0xff]
      %v469 = vld [vmem:[%s2 + $0x10] sm:$0xff]
      %v470 = vld [vmem:[%s2 + $0x18] sm:$0xff]
      %v471 = vld [vmem:[%s2 + $0x20] sm:$0xff]
      %v472 = vld [vmem:[%s2 + $0x28] sm:$0xff]
      %v473 = vld [vmem:[%s2 + $0x30] sm:$0xff]
      %v474 = vld [vmem:[%s2 + $0x38] sm:$0xff]
      %v475 = vld [vmem:[%s2 + $0x40] sm:$0xff]
      %v476 = vld [vmem:[%s2 + $0x48] sm:$0xff]
      %v477 = vld [vmem:[%s2 + $0x50] sm:$0xff]
      %v478 = vld [vmem:[%s2 + $0x58] sm:$0xff]
      %v479 = vld [vmem:[%s2 + $0x60] sm:$0xff]
      %v480 = vld [vmem:[%s2 + $0x68] sm:$0xff]
      %v481 = vld [vmem:[%s2 + $0x70] sm:$0xff]
      %v482 = vld [vmem:[%s2 + $0x78] sm:$0xff]
      %v483 = vlaneseq
      %v484 = vshrl.u32 %v483, 7
      %v485 = vsub.s32 1, %v484
      %v486 = vrot.slane %v347, %v485
      %487 = vmatprep.subr.mxu0 0.0
      %488 = vmatpush1.msra.mxu0 %v467
      %489 = vmatprep.subr.mxu0 0.0
      %490 = vmatpush1.msra.mxu0 %v468
      %491 = vmatprep.subr.mxu0 0.0
      %492 = vmatpush1.msra.mxu0 %v469
      %493 = vmatprep.subr.mxu0 0.0
      %494 = vmatpush1.msra.mxu0 %v470
      %495 = vmatprep.subr.mxu0 0.0
      %496 = vmatpush1.msra.mxu0 %v471
      %497 = vmatprep.subr.mxu0 0.0
      %498 = vmatpush1.msra.mxu0 %v472
      %499 = vmatprep.subr.mxu0 0.0
      %500 = vmatpush1.msra.mxu0 %v473
      %501 = vmatprep.subr.mxu0 0.0
      %502 = vmatpush1.msra.mxu0 %v474
      %503 = vmatprep.subr.mxu0 0.0
      %504 = vmatpush1.msra.mxu0 %v475
      %505 = vmatprep.subr.mxu0 0.0
      %506 = vmatpush1.msra.mxu0 %v476
      %507 = vmatprep.subr.mxu0 0.0
      %508 = vmatpush1.msra.mxu0 %v477
      %509 = vmatprep.subr.mxu0 0.0
      %510 = vmatpush1.msra.mxu0 %v478
      %511 = vmatprep.subr.mxu0 0.0
      %512 = vmatpush1.msra.mxu0 %v479
      %513 = vmatprep.subr.mxu0 0.0
      %514 = vmatpush1.msra.mxu0 %v480
      %515 = vmatprep.subr.mxu0 0.0
      %516 = vmatpush1.msra.mxu0 %v481
      %517 = vmatprep.subr.mxu0 0.0
      %518 = vmatpush1.msra.mxu0 %v482
      %519 = vmatprep.subr.mxu0 0.0
      %520 = vmatpush1.msra.mxu0 0.0
      %521 = vmatprep.subr.mxu0 0.0
      %522 = vmatpush1.msra.mxu0 0.0
      %523 = vmatprep.subr.mxu0 0.0
      %524 = vmatpush1.msra.mxu0 0.0
      %525 = vmatprep.subr.mxu0 0.0
      %526 = vmatpush1.msra.mxu0 0.0
      %527 = vmatprep.subr.mxu0 0.0
      %528 = vmatpush1.msra.mxu0 0.0
      %529 = vmatprep.subr.mxu0 0.0
      %530 = vmatpush1.msra.mxu0 0.0
      %531 = vmatprep.subr.mxu0 0.0
      %532 = vmatpush1.msra.mxu0 0.0
      %533 = vmatprep.subr.mxu0 0.0
      %534 = vmatpush1.msra.mxu0 0.0
      %535 = vmatprep.subr.mxu0 0.0
      %536 = vmatpush1.msra.mxu0 0.0
      %537 = vmatprep.subr.mxu0 0.0
      %538 = vmatpush1.msra.mxu0 0.0
      %539 = vmatprep.subr.mxu0 0.0
      %540 = vmatpush1.msra.mxu0 0.0
      %541 = vmatprep.subr.mxu0 0.0
      %542 = vmatpush1.msra.mxu0 0.0
      %543 = vmatprep.subr.mxu0 0.0
      %544 = vmatpush1.msra.mxu0 0.0
      %545 = vmatprep.subr.mxu0 0.0
      %546 = vmatpush1.msra.mxu0 0.0
      %547 = vmatprep.subr.mxu0 0.0
      %548 = vmatpush1.msra.mxu0 0.0
      %549 = vmatprep.subr.mxu0 0.0
      %550 = vmatpush1.msra.mxu0 0.0
      %551 = vmatprep.mubr.f32.mxu0 0.0
      %552 = vmatmul.mubr.f32.gmra.mrb[0].mxu0 %v464
      %v553 = vpop.f32.mrb[0].mxu0
      %v554 = vadd.f32 %v486, %v553
      %v555 = vpop.f32.mrb[0].mxu0
      %556 = vmatprep.mubr.f32.mxu0 0.0
      %557 = vmatmul.mubr.f32.gmra.mrb[0].mxu0 %v465
      %v558 = vpop.f32.mrb[0].mxu0
      %v559 = vadd.f32 %v486, %v558
      %v560 = vpop.f32.mrb[0].mxu0
      %561 = vmatprep.mubr.f32.mxu0 0.0
      %562 = vmatmul.mubr.f32.gmra.mrb[0].mxu0 %v466
      %v563 = vpop.f32.mrb[0].mxu0
      %v564 = vadd.f32 %v486, %v563
      %v565 = vpop.f32.mrb[0].mxu0
      %566 = vdwg.mxu0
      %v567 = vmax.f32 %v554, 0.0
      %v568 = vmax.f32 %v559, 0.0
      %v569 = vmax.f32 %v564, 0.0
      %v570 = vld [vmem:[%s3] sm:$0xff]
      %v571 = vld [vmem:[%s3 + $0x8] sm:$0xff]
      %v572 = vld [vmem:[%s3 + $0x10] sm:$0xff]
      %v573 = vld [vmem:[%s3 + $0x18] sm:$0xff]
      %v574 = vld [vmem:[%s3 + $0x20] sm:$0xff]
      %v575 = vld [vmem:[%s3 + $0x28] sm:$0xff]
      %v576 = vld [vmem:[%s3 + $0x30] sm:$0xff]
      %v577 = vld [vmem:[%s3 + $0x38] sm:$0xff]
      %v578 = vld [vmem:[%s3 + $0x40] sm:$0xff]
      %v579 = vld [vmem:[%s3 + $0x48] sm:$0xff]
      %v580 = vld [vmem:[%s3 + $0x50] sm:$0xff]
      %v581 = vld [vmem:[%s3 + $0x58] sm:$0xff]
      %v582 = vld [vmem:[%s3 + $0x60] sm:$0xff]
      %v583 = vld [vmem:[%s3 + $0x68] sm:$0xff]
      %v584 = vld [vmem:[%s3 + $0x70] sm:$0xff]
      %v585 = vld [vmem:[%s3 + $0x78] sm:$0xff]
      %v586 = vlaneseq
      %v587 = vshrl.u32 %v586, 7
      %v588 = vsub.s32 2, %v587
      %v589 = vrot.slane %v347, %v588
      %590 = vmatprep.subr.mxu0 0.0
      %591 = vmatpush1.msra.mxu0 %v570
      %592 = vmatprep.subr.mxu0 0.0
      %593 = vmatpush1.msra.mxu0 %v571
      %594 = vmatprep.subr.mxu0 0.0
      %595 = vmatpush1.msra.mxu0 %v572
      %596 = vmatprep.subr.mxu0 0.0
      %597 = vmatpush1.msra.mxu0 %v573
      %598 = vmatprep.subr.mxu0 0.0
      %599 = vmatpush1.msra.mxu0 %v574
      %600 = vmatprep.subr.mxu0 0.0
      %601 = vmatpush1.msra.mxu0 %v575
      %602 = vmatprep.subr.mxu0 0.0
      %603 = vmatpush1.msra.mxu0 %v576
      %604 = vmatprep.subr.mxu0 0.0
      %605 = vmatpush1.msra.mxu0 %v577
      %606 = vmatprep.subr.mxu0 0.0
      %607 = vmatpush1.msra.mxu0 %v578
      %608 = vmatprep.subr.mxu0 0.0
      %609 = vmatpush1.msra.mxu0 %v579
      %610 = vmatprep.subr.mxu0 0.0
      %611 = vmatpush1.msra.mxu0 %v580
      %612 = vmatprep.subr.mxu0 0.0
      %613 = vmatpush1.msra.mxu0 %v581
      %614 = vmatprep.subr.mxu0 0.0
      %615 = vmatpush1.msra.mxu0 %v582
      %616 = vmatprep.subr.mxu0 0.0
      %617 = vmatpush1.msra.mxu0 %v583
      %618 = vmatprep.subr.mxu0 0.0
      %619 = vmatpush1.msra.mxu0 %v584
      %620 = vmatprep.subr.mxu0 0.0
      %621 = vmatpush1.msra.mxu0 %v585
      %622 = vmatprep.subr.mxu0 0.0
      %623 = vmatpush1.msra.mxu0 0.0
      %624 = vmatprep.subr.mxu0 0.0
      %625 = vmatpush1.msra.mxu0 0.0
      %626 = vmatprep.subr.mxu0 0.0
      %627 = vmatpush1.msra.mxu0 0.0
      %628 = vmatprep.subr.mxu0 0.0
      %629 = vmatpush1.msra.mxu0 0.0
      %630 = vmatprep.subr.mxu0 0.0
      %631 = vmatpush1.msra.mxu0 0.0
      %632 = vmatprep.subr.mxu0 0.0
      %633 = vmatpush1.msra.mxu0 0.0
      %634 = vmatprep.subr.mxu0 0.0
      %635 = vmatpush1.msra.mxu0 0.0
      %636 = vmatprep.subr.mxu0 0.0
      %637 = vmatpush1.msra.mxu0 0.0
      %638 = vmatprep.subr.mxu0 0.0
      %639 = vmatpush1.msra.mxu0 0.0
      %640 = vmatprep.subr.mxu0 0.0
      %641 = vmatpush1.msra.mxu0 0.0
      %642 = vmatprep.subr.mxu0 0.0
      %643 = vmatpush1.msra.mxu0 0.0
      %644 = vmatprep.subr.mxu0 0.0
      %645 = vmatpush1.msra.mxu0 0.0
      %646 = vmatprep.subr.mxu0 0.0
      %647 = vmatpush1.msra.mxu0 0.0
      %648 = vmatprep.subr.mxu0 0.0
      %649 = vmatpush1.msra.mxu0 0.0
      %650 = vmatprep.subr.mxu0 0.0
      %651 = vmatpush1.msra.mxu0 0.0
      %652 = vmatprep.subr.mxu0 0.0
      %653 = vmatpush1.msra.mxu0 0.0
      %654 = vmatprep.mubr.f32.mxu0 0.0
      %655 = vmatmul.mubr.f32.gmra.mrb[0].mxu0 %v567
      %v656 = vpop.f32.mrb[0].mxu0
      %v657 = vadd.f32 %v589, %v656
      %v658 = vpop.f32.mrb[0].mxu0
      %659 = vmatprep.mubr.f32.mxu0 0.0
      %660 = vmatmul.mubr.f32.gmra.mrb[0].mxu0 %v568
      %v661 = vpop.f32.mrb[0].mxu0
      %v662 = vadd.f32 %v589, %v661
      %v663 = vpop.f32.mrb[0].mxu0
      %664 = vmatprep.mubr.f32.mxu0 0.0
      %665 = vmatmul.mubr.f32.gmra.mrb[0].mxu0 %v569
      %v666 = vpop.f32.mrb[0].mxu0
      %v667 = vadd.f32 %v589, %v666
      %v668 = vpop.f32.mrb[0].mxu0
      %669 = vdwg.mxu0
      %v670 = vld [vmem:[%s4] sm:$0xff]
      %v671 = vld [vmem:[%s4 + $0x8] sm:$0xff]
      %v672 = vld [vmem:[%s4 + $0x10] sm:$0xff]
      %v673 = vld [vmem:[%s4 + $0x18] sm:$0xff]
      %v674 = vld [vmem:[%s4 + $0x20] sm:$0xff]
      %v675 = vld [vmem:[%s4 + $0x28] sm:$0xff]
      %v676 = vld [vmem:[%s4 + $0x30] sm:$0xff]
      %v677 = vld [vmem:[%s4 + $0x38] sm:$0xff]
      %v678 = vld [vmem:[%s4 + $0x40] sm:$0xff]
      %v679 = vld [vmem:[%s4 + $0x48] sm:$0xff]
      %v680 = vld [vmem:[%s4 + $0x50] sm:$0xff]
      %v681 = vld [vmem:[%s4 + $0x58] sm:$0xff]
      %v682 = vld [vmem:[%s4 + $0x60] sm:$0xff]
      %v683 = vld [vmem:[%s4 + $0x68] sm:$0xff]
      %v684 = vld [vmem:[%s4 + $0x70] sm:$0xff]
      %v685 = vld [vmem:[%s4 + $0x78] sm:$0xff]
      %v686 = vld [vmem:[%s5] sm:$0xff]
      %v687 = vld [vmem:[%s5 + $0x8] sm:$0xff]
      %v688 = vld [vmem:[%s5 + $0x10] sm:$0xff]
      %v689 = vld [vmem:[%s5 + $0x18] sm:$0xff]
      %v690 = vld [vmem:[%s5 + $0x20] sm:$0xff]
      %v691 = vld [vmem:[%s5 + $0x28] sm:$0xff]
      %v692 = vld [vmem:[%s5 + $0x30] sm:$0xff]
      %v693 = vld [vmem:[%s5 + $0x38] sm:$0xff]
      %v694 = vld [vmem:[%s5 + $0x40] sm:$0xff]
      %v695 = vld [vmem:[%s5 + $0x48] sm:$0xff]
      %v696 = vld [vmem:[%s5 + $0x50] sm:$0xff]
      %v697 = vld [vmem:[%s5 + $0x58] sm:$0xff]
      %v698 = vld [vmem:[%s5 + $0x60] sm:$0xff]
      %v699 = vld [vmem:[%s5 + $0x68] sm:$0xff]
      %v700 = vld [vmem:[%s5 + $0x70] sm:$0xff]
      %v701 = vld [vmem:[%s5 + $0x78] sm:$0xff]
      %v702 = vld [vmem:[%s5 + $0x80] sm:$0xff]
      %v703 = vld [vmem:[%s5 + $0x88] sm:$0xff]
      %v704 = vld [vmem:[%s5 + $0x90] sm:$0xff]
      %v705 = vld [vmem:[%s5 + $0x98] sm:$0xff]
      %v706 = vld [vmem:[%s5 + $0xa0] sm:$0xff]
      %v707 = vld [vmem:[%s5 + $0xa8] sm:$0xff]
      %v708 = vld [vmem:[%s5 + $0xb0] sm:$0xff]
      %v709 = vld [vmem:[%s5 + $0xb8] sm:$0xff]
      %v710 = vld [vmem:[%s5 + $0xc0] sm:$0xff]
      %v711 = vld [vmem:[%s5 + $0xc8] sm:$0xff]
      %v712 = vld [vmem:[%s5 + $0xd0] sm:$0xff]
      %v713 = vld [vmem:[%s5 + $0xd8] sm:$0xff]
      %v714 = vld [vmem:[%s5 + $0xe0] sm:$0xff]
      %v715 = vld [vmem:[%s5 + $0xe8] sm:$0xff]
      %v716 = vld [vmem:[%s5 + $0xf0] sm:$0xff]
      %v717 = vld [vmem:[%s5 + $0xf8] sm:$0xff]
      %718 = vmatprep.subr.mxu0 0.0
      %719 = vmatpush1.msra.mxu0 %v686
      %720 = vmatprep.subr.mxu0 0.0
      %721 = vmatpush1.msra.mxu0 %v687
      %722 = vmatprep.subr.mxu0 0.0
      %723 = vmatpush1.msra.mxu0 %v688
      %724 = vmatprep.subr.mxu0 0.0
      %725 = vmatpush1.msra.mxu0 %v689
      %726 = vmatprep.subr.mxu0 0.0
      %727 = vmatpush1.msra.mxu0 %v690
      %728 = vmatprep.subr.mxu0 0.0
      %729 = vmatpush1.msra.mxu0 %v691
      %730 = vmatprep.subr.mxu0 0.0
      %731 = vmatpush1.msra.mxu0 %v692
      %732 = vmatprep.subr.mxu0 0.0
      %733 = vmatpush1.msra.mxu0 %v693
      %734 = vmatprep.subr.mxu0 0.0
      %735 = vmatpush1.msra.mxu0 %v694
      %736 = vmatprep.subr.mxu0 0.0
      %737 = vmatpush1.msra.mxu0 %v695
      %738 = vmatprep.subr.mxu0 0.0
      %739 = vmatpush1.msra.mxu0 %v696
      %740 = vmatprep.subr.mxu0 0.0
      %741 = vmatpush1.msra.mxu0 %v697
      %742 = vmatprep.subr.mxu0 0.0
      %743 = vmatpush1.msra.mxu0 %v698
      %744 = vmatprep.subr.mxu0 0.0
      %745 = vmatpush1.msra.mxu0 %v699
      %746 = vmatprep.subr.mxu0 0.0
      %747 = vmatpush1.msra.mxu0 %v700
      %748 = vmatprep.subr.mxu0 0.0
      %749 = vmatpush1.msra.mxu0 %v701
      %750 = vmatprep.subr.mxu0 0.0
      %751 = vmatpush1.msra.mxu0 %v702
      %752 = vmatprep.subr.mxu0 0.0
      %753 = vmatpush1.msra.mxu0 %v703
      %754 = vmatprep.subr.mxu0 0.0
      %755 = vmatpush1.msra.mxu0 %v704
      %756 = vmatprep.subr.mxu0 0.0
      %757 = vmatpush1.msra.mxu0 %v705
      %758 = vmatprep.subr.mxu0 0.0
      %759 = vmatpush1.msra.mxu0 %v706
      %760 = vmatprep.subr.mxu0 0.0
      %761 = vmatpush1.msra.mxu0 %v707
      %762 = vmatprep.subr.mxu0 0.0
      %763 = vmatpush1.msra.mxu0 %v708
      %764 = vmatprep.subr.mxu0 0.0
      %765 = vmatpush1.msra.mxu0 %v709
      %766 = vmatprep.subr.mxu0 0.0
      %767 = vmatpush1.msra.mxu0 %v710
      %768 = vmatprep.subr.mxu0 0.0
      %769 = vmatpush1.msra.mxu0 %v711
      %770 = vmatprep.subr.mxu0 0.0
      %771 = vmatpush1.msra.mxu0 %v712
      %772 = vmatprep.subr.mxu0 0.0
      %773 = vmatpush1.msra.mxu0 %v713
      %774 = vmatprep.subr.mxu0 0.0
      %775 = vmatpush1.msra.mxu0 %v714
      %776 = vmatprep.subr.mxu0 0.0
      %777 = vmatpush1.msra.mxu0 %v715
      %778 = vmatprep.subr.mxu0 0.0
      %779 = vmatpush1.msra.mxu0 %v716
      %780 = vmatprep.subr.mxu0 0.0
      %781 = vmatpush1.msra.mxu0 %v717
      %782 = vmatprep.mubr.f32.mxu0 %v342
      %783 = vmatmul.mubr.f32.gmra.mrb[0].mxu0 %v341
      %v784 = vpop.f32.mrb[0].mxu0
      %v785 = vadd.f32 0.0, %v784
      %v786 = vpop.f32.mrb[0].mxu0
      %787 = vmatprep.mubr.f32.mxu0 %v344
      %788 = vmatmul.mubr.f32.gmra.mrb[0].mxu0 %v343
      %v789 = vpop.f32.mrb[0].mxu0
      %v790 = vadd.f32 0.0, %v789
      %v791 = vpop.f32.mrb[0].mxu0
      %792 = vmatprep.mubr.f32.mxu0 %v346
      %793 = vmatmul.mubr.f32.gmra.mrb[0].mxu0 %v345
      %v794 = vpop.f32.mrb[0].mxu0
      %v795 = vadd.f32 0.0, %v794
      %v796 = vpop.f32.mrb[0].mxu0
      %797 = vdwg.mxu0
      %798 = vmatprep.subr.mxu0 0.0
      %799 = vmatpush1.msra.mxu0 %v670
      %800 = vmatprep.subr.mxu0 0.0
      %801 = vmatpush1.msra.mxu0 %v671
      %802 = vmatprep.subr.mxu0 0.0
      %803 = vmatpush1.msra.mxu0 %v672
      %804 = vmatprep.subr.mxu0 0.0
      %805 = vmatpush1.msra.mxu0 %v673
      %806 = vmatprep.subr.mxu0 0.0
      %807 = vmatpush1.msra.mxu0 %v674
      %808 = vmatprep.subr.mxu0 0.0
      %809 = vmatpush1.msra.mxu0 %v675
      %810 = vmatprep.subr.mxu0 0.0
      %811 = vmatpush1.msra.mxu0 %v676
      %812 = vmatprep.subr.mxu0 0.0
      %813 = vmatpush1.msra.mxu0 %v677
      %814 = vmatprep.subr.mxu0 0.0
      %815 = vmatpush1.msra.mxu0 %v678
      %816 = vmatprep.subr.mxu0 0.0
      %817 = vmatpush1.msra.mxu0 %v679
      %818 = vmatprep.subr.mxu0 0.0
      %819 = vmatpush1.msra.mxu0 %v680
      %820 = vmatprep.subr.mxu0 0.0
      %821 = vmatpush1.msra.mxu0 %v681
      %822 = vmatprep.subr.mxu0 0.0
      %823 = vmatpush1.msra.mxu0 %v682
      %824 = vmatprep.subr.mxu0 0.0
      %825 = vmatpush1.msra.mxu0 %v683
      %826 = vmatprep.subr.mxu0 0.0
      %827 = vmatpush1.msra.mxu0 %v684
      %828 = vmatprep.subr.mxu0 0.0
      %829 = vmatpush1.msra.mxu0 %v685
      %830 = vmatprep.subr.mxu0 0.0
      %831 = vmatpush1.msra.mxu0 0.0
      %832 = vmatprep.subr.mxu0 0.0
      %833 = vmatpush1.msra.mxu0 0.0
      %834 = vmatprep.subr.mxu0 0.0
      %835 = vmatpush1.msra.mxu0 0.0
      %836 = vmatprep.subr.mxu0 0.0
      %837 = vmatpush1.msra.mxu0 0.0
      %838 = vmatprep.subr.mxu0 0.0
      %839 = vmatpush1.msra.mxu0 0.0
      %840 = vmatprep.subr.mxu0 0.0
      %841 = vmatpush1.msra.mxu0 0.0
      %842 = vmatprep.subr.mxu0 0.0
      %843 = vmatpush1.msra.mxu0 0.0
      %844 = vmatprep.subr.mxu0 0.0
      %845 = vmatpush1.msra.mxu0 0.0
      %846 = vmatprep.subr.mxu0 0.0
      %847 = vmatpush1.msra.mxu0 0.0
      %848 = vmatprep.subr.mxu0 0.0
      %849 = vmatpush1.msra.mxu0 0.0
      %850 = vmatprep.subr.mxu0 0.0
      %851 = vmatpush1.msra.mxu0 0.0
      %852 = vmatprep.subr.mxu0 0.0
      %853 = vmatpush1.msra.mxu0 0.0
      %854 = vmatprep.subr.mxu0 0.0
      %855 = vmatpush1.msra.mxu0 0.0
      %856 = vmatprep.subr.mxu0 0.0
      %857 = vmatpush1.msra.mxu0 0.0
      %858 = vmatprep.subr.mxu0 0.0
      %859 = vmatpush1.msra.mxu0 0.0
      %860 = vmatprep.subr.mxu0 0.0
      %861 = vmatpush1.msra.mxu0 0.0
      %862 = vmatprep.mubr.f32.mxu0 0.0
      %863 = vmatmul.mubr.f32.gmra.mrb[0].mxu0 %v657
      %v864 = vpop.f32.mrb[0].mxu0
      %v865 = vadd.f32 %v785, %v864
      %v866 = vpop.f32.mrb[0].mxu0
      %867 = vmatprep.mubr.f32.mxu0 0.0
      %868 = vmatmul.mubr.f32.gmra.mrb[0].mxu0 %v662
      %v869 = vpop.f32.mrb[0].mxu0
      %v870 = vadd.f32 %v790, %v869
      %v871 = vpop.f32.mrb[0].mxu0
      %872 = vmatprep.mubr.f32.mxu0 0.0
      %873 = vmatmul.mubr.f32.gmra.mrb[0].mxu0 %v667
      %v874 = vpop.f32.mrb[0].mxu0
      %v875 = vadd.f32 %v795, %v874
      %v876 = vpop.f32.mrb[0].mxu0
      %877 = vdwg.mxu0
      %v878 = vlaneseq
      %v879 = vshrl.u32 %v878, 7
      %v880 = vsub.s32 3, %v879
      %v881 = vrot.slane %v347, %v880
      %v882 = vadd.f32 %v865, %v881
      %v883 = vadd.f32 %v870, %v881
      %v884 = vadd.f32 %v875, %v881
      %v885 = vmax.f32 %v882, 0.0
      %v886 = vmax.f32 %v883, 0.0
      %v887 = vmax.f32 %v884, 0.0
      %v888 = vld [vmem:[%s6] sm:$0xff]
      %v889 = vld [vmem:[%s6 + $0x8] sm:$0xff]
      %v890 = vld [vmem:[%s6 + $0x10] sm:$0xff]
      %v891 = vld [vmem:[%s6 + $0x18] sm:$0xff]
      %v892 = vld [vmem:[%s6 + $0x20] sm:$0xff]
      %v893 = vld [vmem:[%s6 + $0x28] sm:$0xff]
      %v894 = vld [vmem:[%s6 + $0x30] sm:$0xff]
      %v895 = vld [vmem:[%s6 + $0x38] sm:$0xff]
      %v896 = vld [vmem:[%s6 + $0x40] sm:$0xff]
      %v897 = vld [vmem:[%s6 + $0x48] sm:$0xff]
      %v898 = vld [vmem:[%s6 + $0x50] sm:$0xff]
      %v899 = vld [vmem:[%s6 + $0x58] sm:$0xff]
      %v900 = vld [vmem:[%s6 + $0x60] sm:$0xff]
      %v901 = vld [vmem:[%s6 + $0x68] sm:$0xff]
      %v902 = vld [vmem:[%s6 + $0x70] sm:$0xff]
      %v903 = vld [vmem:[%s6 + $0x78] sm:$0xff]
      %v904 = vlaneseq
      %v905 = vshrl.u32 %v904, 7
      %v906 = vsub.s32 4, %v905
      %v907 = vrot.slane %v347, %v906
      %908 = vmatprep.subr.mxu0 0.0
      %909 = vmatpush1.msra.mxu0 %v888
      %910 = vmatprep.subr.mxu0 0.0
      %911 = vmatpush1.msra.mxu0 %v889
      %912 = vmatprep.subr.mxu0 0.0
      %913 = vmatpush1.msra.mxu0 %v890
      %914 = vmatprep.subr.mxu0 0.0
      %915 = vmatpush1.msra.mxu0 %v891
      %916 = vmatprep.subr.mxu0 0.0
      %917 = vmatpush1.msra.mxu0 %v892
      %918 = vmatprep.subr.mxu0 0.0
      %919 = vmatpush1.msra.mxu0 %v893
      %920 = vmatprep.subr.mxu0 0.0
      %921 = vmatpush1.msra.mxu0 %v894
      %922 = vmatprep.subr.mxu0 0.0
      %923 = vmatpush1.msra.mxu0 %v895
      %924 = vmatprep.subr.mxu0 0.0
      %925 = vmatpush1.msra.mxu0 %v896
      %926 = vmatprep.subr.mxu0 0.0
      %927 = vmatpush1.msra.mxu0 %v897
      %928 = vmatprep.subr.mxu0 0.0
      %929 = vmatpush1.msra.mxu0 %v898
      %930 = vmatprep.subr.mxu0 0.0
      %931 = vmatpush1.msra.mxu0 %v899
      %932 = vmatprep.subr.mxu0 0.0
      %933 = vmatpush1.msra.mxu0 %v900
      %934 = vmatprep.subr.mxu0 0.0
      %935 = vmatpush1.msra.mxu0 %v901
      %936 = vmatprep.subr.mxu0 0.0
      %937 = vmatpush1.msra.mxu0 %v902
      %938 = vmatprep.subr.mxu0 0.0
      %939 = vmatpush1.msra.mxu0 %v903
      %940 = vmatprep.subr.mxu0 0.0
      %941 = vmatpush1.msra.mxu0 0.0
      %942 = vmatprep.subr.mxu0 0.0
      %943 = vmatpush1.msra.mxu0 0.0
      %944 = vmatprep.subr.mxu0 0.0
      %945 = vmatpush1.msra.mxu0 0.0
      %946 = vmatprep.subr.mxu0 0.0
      %947 = vmatpush1.msra.mxu0 0.0
      %948 = vmatprep.subr.mxu0 0.0
      %949 = vmatpush1.msra.mxu0 0.0
      %950 = vmatprep.subr.mxu0 0.0
      %951 = vmatpush1.msra.mxu0 0.0
      %952 = vmatprep.subr.mxu0 0.0
      %953 = vmatpush1.msra.mxu0 0.0
      %954 = vmatprep.subr.mxu0 0.0
      %955 = vmatpush1.msra.mxu0 0.0
      %956 = vmatprep.subr.mxu0 0.0
      %957 = vmatpush1.msra.mxu0 0.0
      %958 = vmatprep.subr.mxu0 0.0
      %959 = vmatpush1.msra.mxu0 0.0
      %960 = vmatprep.subr.mxu0 0.0
      %961 = vmatpush1.msra.mxu0 0.0
      %962 = vmatprep.subr.mxu0 0.0
      %963 = vmatpush1.msra.mxu0 0.0
      %964 = vmatprep.subr.mxu0 0.0
      %965 = vmatpush1.msra.mxu0 0.0
      %966 = vmatprep.subr.mxu0 0.0
      %967 = vmatpush1.msra.mxu0 0.0
      %968 = vmatprep.subr.mxu0 0.0
      %969 = vmatpush1.msra.mxu0 0.0
      %970 = vmatprep.subr.mxu0 0.0
      %971 = vmatpush1.msra.mxu0 0.0
      %972 = vmatprep.mubr.f32.mxu0 0.0
      %973 = vmatmul.mubr.f32.gmra.mrb[0].mxu0 %v885
      %v974 = vpop.f32.mrb[0].mxu0
      %v975 = vadd.f32 %v907, %v974
      %v976 = vpop.f32.mrb[0].mxu0
      %977 = vmatprep.mubr.f32.mxu0 0.0
      %978 = vmatmul.mubr.f32.gmra.mrb[0].mxu0 %v886
      %v979 = vpop.f32.mrb[0].mxu0
      %v980 = vadd.f32 %v907, %v979
      %v981 = vpop.f32.mrb[0].mxu0
      %982 = vmatprep.mubr.f32.mxu0 0.0
      %983 = vmatmul.mubr.f32.gmra.mrb[0].mxu0 %v887
      %v984 = vpop.f32.mrb[0].mxu0
      %v985 = vadd.f32 %v907, %v984
      %v986 = vpop.f32.mrb[0].mxu0
      %987 = vdwg.mxu0
      %v988 = vmax.f32 %v975, 0.0
      %v989 = vmax.f32 %v980, 0.0
      %v990 = vmax.f32 %v985, 0.0
      %v991 = vld [vmem:[%s7] sm:$0xff]
      %v992 = vld [vmem:[%s7 + $0x8] sm:$0xff]
      %v993 = vld [vmem:[%s7 + $0x10] sm:$0xff]
      %v994 = vld [vmem:[%s7 + $0x18] sm:$0xff]
      %v995 = vld [vmem:[%s7 + $0x20] sm:$0xff]
      %v996 = vld [vmem:[%s7 + $0x28] sm:$0xff]
      %v997 = vld [vmem:[%s7 + $0x30] sm:$0xff]
      %v998 = vld [vmem:[%s7 + $0x38] sm:$0xff]
      %v999 = vld [vmem:[%s7 + $0x40] sm:$0xff]
      %v1000 = vld [vmem:[%s7 + $0x48] sm:$0xff]
      %v1001 = vld [vmem:[%s7 + $0x50] sm:$0xff]
      %v1002 = vld [vmem:[%s7 + $0x58] sm:$0xff]
      %v1003 = vld [vmem:[%s7 + $0x60] sm:$0xff]
      %v1004 = vld [vmem:[%s7 + $0x68] sm:$0xff]
      %v1005 = vld [vmem:[%s7 + $0x70] sm:$0xff]
      %v1006 = vld [vmem:[%s7 + $0x78] sm:$0xff]
      %v1007 = vlaneseq
      %v1008 = vshrl.u32 %v1007, 7
      %v1009 = vsub.s32 5, %v1008
      %v1010 = vrot.slane %v347, %v1009
      %1011 = vmatprep.subr.mxu0 0.0
      %1012 = vmatpush1.msra.mxu0 %v991
      %1013 = vmatprep.subr.mxu0 0.0
      %1014 = vmatpush1.msra.mxu0 %v992
      %1015 = vmatprep.subr.mxu0 0.0
      %1016 = vmatpush1.msra.mxu0 %v993
      %1017 = vmatprep.subr.mxu0 0.0
      %1018 = vmatpush1.msra.mxu0 %v994
      %1019 = vmatprep.subr.mxu0 0.0
      %1020 = vmatpush1.msra.mxu0 %v995
      %1021 = vmatprep.subr.mxu0 0.0
      %1022 = vmatpush1.msra.mxu0 %v996
      %1023 = vmatprep.subr.mxu0 0.0
      %1024 = vmatpush1.msra.mxu0 %v997
      %1025 = vmatprep.subr.mxu0 0.0
      %1026 = vmatpush1.msra.mxu0 %v998
      %1027 = vmatprep.subr.mxu0 0.0
      %1028 = vmatpush1.msra.mxu0 %v999
      %1029 = vmatprep.subr.mxu0 0.0
      %1030 = vmatpush1.msra.mxu0 %v1000
      %1031 = vmatprep.subr.mxu0 0.0
      %1032 = vmatpush1.msra.mxu0 %v1001
      %1033 = vmatprep.subr.mxu0 0.0
      %1034 = vmatpush1.msra.mxu0 %v1002
      %1035 = vmatprep.subr.mxu0 0.0
      %1036 = vmatpush1.msra.mxu0 %v1003
      %1037 = vmatprep.subr.mxu0 0.0
      %1038 = vmatpush1.msra.mxu0 %v1004
      %1039 = vmatprep.subr.mxu0 0.0
      %1040 = vmatpush1.msra.mxu0 %v1005
      %1041 = vmatprep.subr.mxu0 0.0
      %1042 = vmatpush1.msra.mxu0 %v1006
      %1043 = vmatprep.subr.mxu0 0.0
      %1044 = vmatpush1.msra.mxu0 0.0
      %1045 = vmatprep.subr.mxu0 0.0
      %1046 = vmatpush1.msra.mxu0 0.0
      %1047 = vmatprep.subr.mxu0 0.0
      %1048 = vmatpush1.msra.mxu0 0.0
      %1049 = vmatprep.subr.mxu0 0.0
      %1050 = vmatpush1.msra.mxu0 0.0
      %1051 = vmatprep.subr.mxu0 0.0
      %1052 = vmatpush1.msra.mxu0 0.0
      %1053 = vmatprep.subr.mxu0 0.0
      %1054 = vmatpush1.msra.mxu0 0.0
      %1055 = vmatprep.subr.mxu0 0.0
      %1056 = vmatpush1.msra.mxu0 0.0
      %1057 = vmatprep.subr.mxu0 0.0
      %1058 = vmatpush1.msra.mxu0 0.0
      %1059 = vmatprep.subr.mxu0 0.0
      %1060 = vmatpush1.msra.mxu0 0.0
      %1061 = vmatprep.subr.mxu0 0.0
      %1062 = vmatpush1.msra.mxu0 0.0
      %1063 = vmatprep.subr.mxu0 0.0
      %1064 = vmatpush1.msra.mxu0 0.0
      %1065 = vmatprep.subr.mxu0 0.0
      %1066 = vmatpush1.msra.mxu0 0.0
      %1067 = vmatprep.subr.mxu0 0.0
      %1068 = vmatpush1.msra.mxu0 0.0
      %1069 = vmatprep.subr.mxu0 0.0
      %1070 = vmatpush1.msra.mxu0 0.0
      %1071 = vmatprep.subr.mxu0 0.0
      %1072 = vmatpush1.msra.mxu0 0.0
      %1073 = vmatprep.subr.mxu0 0.0
      %1074 = vmatpush1.msra.mxu0 0.0
      %1075 = vmatprep.mubr.f32.mxu0 0.0
      %1076 = vmatmul.mubr.f32.gmra.mrb[0].mxu0 %v988
      %v1077 = vpop.f32.mrb[0].mxu0
      %v1078 = vadd.f32 %v1010, %v1077
      %v1079 = vpop.f32.mrb[0].mxu0
      %1080 = vmatprep.mubr.f32.mxu0 0.0
      %1081 = vmatmul.mubr.f32.gmra.mrb[0].mxu0 %v989
      %v1082 = vpop.f32.mrb[0].mxu0
      %v1083 = vadd.f32 %v1010, %v1082
      %v1084 = vpop.f32.mrb[0].mxu0
      %1085 = vmatprep.mubr.f32.mxu0 0.0
      %1086 = vmatmul.mubr.f32.gmra.mrb[0].mxu0 %v990
      %v1087 = vpop.f32.mrb[0].mxu0
      %v1088 = vadd.f32 %v1010, %v1087
      %v1089 = vpop.f32.mrb[0].mxu0
      %1090 = vdwg.mxu0
      %v1091 = vmul.f32 %v657, %v342
      %v1092 = vmul.f32 %v662, %v344
      %v1093 = vmul.f32 %v667, %v346
      %1094 = vst [vmem:[%s339] sm:$0xff] %v1091
      %1095 = vst [vmem:[%s339 + $0x10] sm:$0xff] %v1092
      %1096 = vst [vmem:[%s339 + $0x20] sm:$0xff] %v1093
      %v1097 = vmax.f32 %v1078, 0.0
      %v1098 = vmax.f32 %v1083, 0.0
      %v1099 = vmax.f32 %v1088, 0.0
      %v1100 = vand.u32 2147483647, %v1078
      %v1101 = vand.u32 2147483647, %v1083
      %v1102 = vand.u32 2147483647, %v1088
      %v1103 = vsub.f32 0.0, %v1100
      %v1104 = vsub.f32 0.0, %v1101
      %v1105 = vsub.f32 0.0, %v1102
      %v1106 = vmul.f32 %v1103, 1.442695
      %v1107 = vpow.pop %v1106
      %v1108 = vmul.f32 %v1104, 1.442695
      %v1109 = vpow.pop %v1108
      %v1110 = vmul.f32 %v1105, 1.442695
      %v1111 = vpow.pop %v1110
      %v1112 = vadd.f32 %v1107, 1.0
      %v1113 = vlog2.pop %v1112
      %v1114 = vmul.f32 %v1113, 0.6931472
      %v1115 = vmul.f32 -0.5, %v1107
      %v1116 = vadd.f32 %v1115, 1.0
      %v1117 = vmul.f32 %v1116, %v1107
      %v1118 = vand.u32 2147483647, %v1107
      %vm1119 = vcmp.lt.f32.partialorder %v1118, 0.0004427343
      %v1120 = vsel %vm1119, %v1117, %v1114
      %v1121 = vadd.f32 %v1109, 1.0
      %v1122 = vlog2.pop %v1121
      %v1123 = vmul.f32 %v1122, 0.6931472
      %v1124 = vmul.f32 -0.5, %v1109
      %v1125 = vadd.f32 %v1124, 1.0
      %v1126 = vmul.f32 %v1125, %v1109
      %v1127 = vand.u32 2147483647, %v1109
      %vm1128 = vcmp.lt.f32.partialorder %v1127, 0.0004427343
      %v1129 = vsel %vm1128, %v1126, %v1123
      %v1130 = vadd.f32 %v1111, 1.0
      %v1131 = vlog2.pop %v1130
      %v1132 = vmul.f32 %v1131, 0.6931472
      %v1133 = vmul.f32 -0.5, %v1111
      %v1134 = vadd.f32 %v1133, 1.0
      %v1135 = vmul.f32 %v1134, %v1111
      %v1136 = vand.u32 2147483647, %v1111
      %vm1137 = vcmp.lt.f32.partialorder %v1136, 0.0004427343
      %v1138 = vsel %vm1137, %v1135, %v1132
      %v1139 = vadd.f32 %v1097, %v1120
      %v1140 = vadd.f32 %v1098, %v1129
      %v1141 = vadd.f32 %v1099, %v1138
      %v1142 = vadd.f32 %v1139, 1e-05
      %v1143 = vadd.f32 %v1140, 1e-05
      %v1144 = vadd.f32 %v1141, 1e-05
      %1145 = vst [vmem:[%s339 + $0x8] sm:$0xff] %v1142
      %1146 = vst [vmem:[%s339 + $0x18] sm:$0xff] %v1143
      %1147 = vst [vmem:[%s339 + $0x28] sm:$0xff] %v1144
      %s1148 = smul.u32 3, %s20
      %p1149 = scmp.lt.s32.totalorder %s1148, 5
      %s1150 = scalar_select %p1149, %s1148, 5
      %s1151 = smul.addr %s1150, 2
      %s1152 = smul.addr %s1151, 8
      %s1153 = scalar_lea.vmem %s9, %s1152
      // Predicated region
      $region57: #{model_forward.3} parent=55 // pred_check
        %p1154 = pneg %p232
      $region58: #{model_forward.3} parent=55 // pred_check_branch
        %1156 = sbr.rel (%p1154) target = $region60
      $region59: #{model_forward.3} parent=55 // pred_region
        %s1157 = smul.u32 3, %s20
      $region60: #{model_forward.3} parent=55 // pred_fallthru
        _
    $region56: #{model_forward.3} parent=5 // pred_fallthru
      _
    %p1158 = scmp.le.s32.totalorder 2, %s15
    // Predicated region
    $region61: #{model_forward.3} parent=5 // pred_check
      %p1159 = pneg %p1158
    $region62: #{model_forward.3} parent=5 // pred_check_branch
      %1161 = sbr.rel (%p1159) target = $region64
    $region63: #{model_forward.3} parent=5 // pred_region
      %s1162 = ssub.s32 %s15, 2
      // Predicated region
      $region65: #{model_forward.3} parent=63 // pred_check
        %p1163 = pneg %p238
      $region66: #{model_forward.3} parent=63 // pred_check_branch
        %1165 = sbr.rel (%p1163) target = $region68
      $region67: #{model_forward.3} parent=63 // pred_region
        %s1166 = smul.u32 3, %s21
        %p1167 = scmp.lt.s32.totalorder %s1166, 5
        %s1168 = scalar_select %p1167, %s1166, 5
        %s1169 = smul.addr %s1168, 2
        %s1170 = smul.addr %s1169, 8
        %s1171 = scalar_lea.vmem %s9, %s1170
      $region68: #{model_forward.3} parent=63 // pred_fallthru
        _
    $region64: #{model_forward.3} parent=5 // pred_fallthru
      _
  $region6: #{model_forward.3} parent=0 // loop_footer
    %s19 = sadd.s32 1, %s15
  $region7: #{model_forward.3} parent=0 // loop_footer_branch
    %14 = sbr.rel target = $region3
  $region8: #{model_forward.3} parent=0 // loop_exit
    _

</llo_original>
